<compile_context>
chip_gen: v7x
topology: tpu7x:2x2x1
jax: 0.10.0
libtpu: 0.0.40
codegen_flags: <defaults>
</compile_context>

<pallas_src>
import functools

import jax
import jax.numpy as jnp
from jax.experimental import pallas as pl
from jax.experimental.pallas import tpu as pltpu


# ----------------------------------------------------------------------------
# GRUCell math (PyTorch nn.GRUCell semantics, gate order r / z / n).
# wih/whh: 3-long lists of (in, H)/(H, H); bih/bhh: 3-long lists of (1, H).
# ----------------------------------------------------------------------------
def _gru_cell(x, h_prev, wih, bih, whh, bhh):
    gi_r = jnp.dot(x, wih[0], preferred_element_type=jnp.float32) + bih[0]
    gi_z = jnp.dot(x, wih[1], preferred_element_type=jnp.float32) + bih[1]
    gi_n = jnp.dot(x, wih[2], preferred_element_type=jnp.float32) + bih[2]
    gh_r = jnp.dot(h_prev, whh[0], preferred_element_type=jnp.float32) + bhh[0]
    gh_z = jnp.dot(h_prev, whh[1], preferred_element_type=jnp.float32) + bhh[1]
    gh_n = jnp.dot(h_prev, whh[2], preferred_element_type=jnp.float32) + bhh[2]
    r = jax.nn.sigmoid(gi_r + gh_r)
    z = jax.nn.sigmoid(gi_z + gh_z)
    n = jnp.tanh(gi_n + r * gh_n)
    return (1.0 - z) * n + z * h_prev


# ----------------------------------------------------------------------------
# Pallas kernel: whole GRU stack for one batch tile.
# ----------------------------------------------------------------------------
def stacked_gru_kernel(x_ref, h0_ref, wih0_ref, bih0_ref,
                       wihr_ref, bihr_ref, whh_ref, bhh_ref,
                       out_ref, h1_ref, *, num_layers):
    # Layer 0: input projection from the raw input tile.
    h = _gru_cell(
        x_ref[...], h0_ref[0],
        [wih0_ref[g] for g in range(3)], [bih0_ref[g] for g in range(3)],
        [whh_ref[0, g] for g in range(3)], [bhh_ref[0, g] for g in range(3)])
    h1_ref[0] = h.astype(h1_ref.dtype)

    # Layers 1..L-1: fully unrolled (num_layers is a static hyperparameter).
    for l in range(1, num_layers):
        # TODO(synk): inter-layer nn.Dropout is eval-mode identity here;
        # training-mode stochastic dropout would need pltpu.prng_* masking.
        h = _gru_cell(
            h, h0_ref[l],
            [wihr_ref[l - 1, g] for g in range(3)],
            [bihr_ref[l - 1, g] for g in range(3)],
            [whh_ref[l, g] for g in range(3)],
            [bhh_ref[l, g] for g in range(3)])
        h1_ref[l] = h.astype(h1_ref.dtype)

    out_ref[...] = h.astype(out_ref.dtype)


# ----------------------------------------------------------------------------
# Wrapper: weight re-layout, batch padding, pallas_call.
# ----------------------------------------------------------------------------
def stacked_gru_forward(x, hidden, layer_params, *, block_b=8):
    """x: (B, input_size); hidden: (L, B, rnn_size).

    layer_params: list (len L) of dicts with PyTorch-layout GRUCell weights:
      w_ih (3H, in), w_hh (3H, H), b_ih (3H,), b_hh (3H,), gate order [r|z|n].
    Returns (output, h_1) = ((B, H), (L, B, H)) matching StackedGRU.forward.
    """
    B, E = x.shape
    L, _, H = hidden.shape
    assert len(layer_params) == L

    # Gate-major layout (3, in, H): each gate's weight is its own matmul
    # operand, so the kernel never slices a (B, 3H) result at 32/96-lane
    # boundaries inside a vreg.
    def to_gate_major(w, in_size):
        return jnp.transpose(w.reshape(3, H, in_size), (0, 2, 1))

    wih0 = to_gate_major(layer_params[0]["w_ih"], E)                 # (3,E,H)
    bih0 = layer_params[0]["b_ih"].reshape(3, 1, H)                  # (3,1,H)
    whh = jnp.stack([to_gate_major(p["w_hh"], H) for p in layer_params])   # (L,3,H,H)
    bhh = jnp.stack([p["b_hh"].reshape(3, 1, H) for p in layer_params])    # (L,3,1,H)
    if L > 1:
        wihr = jnp.stack([to_gate_major(p["w_ih"], H) for p in layer_params[1:]])
        bihr = jnp.stack([p["b_ih"].reshape(3, 1, H) for p in layer_params[1:]])
    else:
        wihr = jnp.zeros((1, 3, H, H), jnp.float32)   # dummy, never read
        bihr = jnp.zeros((1, 3, 1, H), jnp.float32)
    Lr = wihr.shape[0]

    # Pad batch to a multiple of the sublane-friendly tile (8) so every
    # (Bt, H) tile fills whole 8-sublane vregs; padded rows are discarded.
    Bp = ((B + block_b - 1) // block_b) * block_b
    if Bp != B:
        x = jnp.pad(x, ((0, Bp - B), (0, 0)))
        hidden = jnp.pad(hidden, ((0, 0), (0, Bp - B), (0, 0)))

    kernel = functools.partial(stacked_gru_kernel, num_layers=L)

    out, h1 = pl.pallas_call(
        kernel,
        out_shape=(jax.ShapeDtypeStruct((Bp, H), jnp.float32),
                   jax.ShapeDtypeStruct((L, Bp, H), jnp.float32)),
        grid=(Bp // block_b,),
        in_specs=[
            pl.BlockSpec((block_b, E), lambda b: (b, 0)),        # x tile
            pl.BlockSpec((L, block_b, H), lambda b: (0, b, 0)),  # h0 tile
            pl.BlockSpec((3, E, H), lambda b: (0, 0, 0)),        # wih layer 0
            pl.BlockSpec((3, 1, H), lambda b: (0, 0, 0)),        # bih layer 0
            pl.BlockSpec((Lr, 3, H, H), lambda b: (0, 0, 0, 0)),  # wih layers 1..
            pl.BlockSpec((Lr, 3, 1, H), lambda b: (0, 0, 0, 0)),  # bih layers 1..
            pl.BlockSpec((L, 3, H, H), lambda b: (0, 0, 0, 0)),   # whh all layers
            pl.BlockSpec((L, 3, 1, H), lambda b: (0, 0, 0, 0)),   # bhh all layers
        ],
        out_specs=(
            pl.BlockSpec((block_b, H), lambda b: (b, 0)),        # top-layer output
            pl.BlockSpec((L, block_b, H), lambda b: (0, b, 0)),  # stacked h_1
        ),
        compiler_params=pltpu.CompilerParams(
            dimension_semantics=("parallel",)),
    )(x.astype(jnp.float32), hidden.astype(jnp.float32),
      wih0, bih0, wihr, bihr, whh, bhh)

    return out[:B], h1[:, :B]


# ----------------------------------------------------------------------------
# Pure-JAX reference (mirrors nn.GRUCell / StackedGRU.forward, eval mode).
# ----------------------------------------------------------------------------
def _gru_cell_ref(x, h, w_ih, w_hh, b_ih, b_hh):
    H = h.shape[-1]
    hi = jax.lax.Precision.HIGHEST
    gi = jnp.dot(x, w_ih.T, precision=hi) + b_ih
    gh = jnp.dot(h, w_hh.T, precision=hi) + b_hh
    r = jax.nn.sigmoid(gi[:, :H] + gh[:, :H])
    z = jax.nn.sigmoid(gi[:, H:2 * H] + gh[:, H:2 * H])
    n = jnp.tanh(gi[:, 2 * H:] + r * gh[:, 2 * H:])
    return (1.0 - z) * n + z * h


def reference_forward(x, hidden, layer_params):
    h1 = []
    inp = x
    for l, p in enumerate(layer_params):
        h_l = _gru_cell_ref(inp, hidden[l], p["w_ih"], p["w_hh"],
                            p["b_ih"], p["b_hh"])
        inp = h_l                       # dropout is identity (eval mode)
        h1.append(h_l)
    return inp, jnp.stack(h1)


# ----------------------------------------------------------------------------
# Deterministic example + check.
# ----------------------------------------------------------------------------
if __name__ == "__main__":
    NUM_LAYERS = 2
    INPUT_SIZE = 64      # input_size of layer 0
    RNN_SIZE = 128       # rnn_size (lane-dense)
    B = 16               # batch (multiple of 8 sublanes)

    key = jax.random.PRNGKey(0)
    keys = jax.random.split(key, 2 + 4 * NUM_LAYERS)

    layer_params = []
    in_size = INPUT_SIZE
    s = 0.1
    for l in range(NUM_LAYERS):
        k0, k1, k2, k3 = keys[2 + 4 * l: 6 + 4 * l]
        layer_params.append({
            "w_ih": s * jax.random.normal(k0, (3 * RNN_SIZE, in_size), jnp.float32),
            "w_hh": s * jax.random.normal(k1, (3 * RNN_SIZE, RNN_SIZE), jnp.float32),
            "b_ih": s * jax.random.normal(k2, (3 * RNN_SIZE,), jnp.float32),
            "b_hh": s * jax.random.normal(k3, (3 * RNN_SIZE,), jnp.float32),
        })
        in_size = RNN_SIZE

    x = 0.1 * jax.random.normal(keys[0], (B, INPUT_SIZE), jnp.float32)
    hidden = 0.1 * jax.random.normal(keys[1], (NUM_LAYERS, B, RNN_SIZE), jnp.float32)

    out, h1 = jax.block_until_ready(stacked_gru_forward(x, hidden, layer_params))
    out_ref, h1_ref = reference_forward(x, hidden, layer_params)

    assert out.shape == (B, RNN_SIZE)
    assert h1.shape == (NUM_LAYERS, B, RNN_SIZE)
    assert jnp.allclose(out, out_ref, atol=1e-4, rtol=1e-4)
    assert jnp.allclose(h1, h1_ref, atol=1e-4, rtol=1e-4)

    print("KERNEL_OK")
</pallas_src>

<mosaic_0001>
module attributes {stable_mosaic.version = 11 : i64} {
  func.func @stacked_gru_kernel(%arg0: i32, %arg1: memref<8x64xf32, #tpu.memory_space<vmem>>, %arg2: memref<2x8x128xf32, #tpu.memory_space<vmem>>, %arg3: memref<3x64x128xf32, #tpu.memory_space<vmem>>, %arg4: memref<3x1x128xf32, #tpu.memory_space<vmem>>, %arg5: memref<1x3x128x128xf32, #tpu.memory_space<vmem>>, %arg6: memref<1x3x1x128xf32, #tpu.memory_space<vmem>>, %arg7: memref<2x3x128x128xf32, #tpu.memory_space<vmem>>, %arg8: memref<2x3x1x128xf32, #tpu.memory_space<vmem>>, %arg9: memref<8x128xf32, #tpu.memory_space<vmem>>, %arg10: memref<2x8x128xf32, #tpu.memory_space<vmem>>) attributes {dimension_semantics = [#tpu.dimension_semantics<parallel>], iteration_bounds = array<i64: 2>, scalar_prefetch = 0 : i64, scratch_operands = 0 : i64, tpu.core_type = #tpu.core_type<tc>, window_params = [{transform_indices = @transform_0, window_bounds = array<i64: 8, 64>}, {transform_indices = @transform_1, window_bounds = array<i64: 2, 8, 128>}, {pipeline_mode = #tpu.pipeline_mode<synchronous>, transform_indices = @transform_2, window_bounds = array<i64: 3, 64, 128>}, {pipeline_mode = #tpu.pipeline_mode<synchronous>, transform_indices = @transform_3, window_bounds = array<i64: 3, 1, 128>}, {pipeline_mode = #tpu.pipeline_mode<synchronous>, transform_indices = @transform_4, window_bounds = array<i64: 1, 3, 128, 128>}, {pipeline_mode = #tpu.pipeline_mode<synchronous>, transform_indices = @transform_5, window_bounds = array<i64: 1, 3, 1, 128>}, {pipeline_mode = #tpu.pipeline_mode<synchronous>, transform_indices = @transform_6, window_bounds = array<i64: 2, 3, 128, 128>}, {pipeline_mode = #tpu.pipeline_mode<synchronous>, transform_indices = @transform_7, window_bounds = array<i64: 2, 3, 1, 128>}, {transform_indices = @transform_8, window_bounds = array<i64: 8, 128>}, {transform_indices = @transform_9, window_bounds = array<i64: 2, 8, 128>}]} {
    %c0 = arith.constant 0 : index
    %c0_0 = arith.constant 0 : index
    %0 = vector.load %arg1[%c0, %c0_0] : memref<8x64xf32, #tpu.memory_space<vmem>>, vector<8x64xf32>
    %c0_1 = arith.constant 0 : index
    %c0_2 = arith.constant 0 : index
    %c0_3 = arith.constant 0 : index
    %1 = vector.load %arg2[%c0_1, %c0_2, %c0_3] : memref<2x8x128xf32, #tpu.memory_space<vmem>>, vector<1x8x128xf32>
    %2 = vector.shape_cast %1 : vector<1x8x128xf32> to vector<8x128xf32>
    %c0_4 = arith.constant 0 : index
    %c0_5 = arith.constant 0 : index
    %c0_6 = arith.constant 0 : index
    %3 = vector.load %arg3[%c0_4, %c0_5, %c0_6] : memref<3x64x128xf32, #tpu.memory_space<vmem>>, vector<1x64x128xf32>
    %4 = vector.shape_cast %3 : vector<1x64x128xf32> to vector<64x128xf32>
    %c1 = arith.constant 1 : index
    %c0_7 = arith.constant 0 : index
    %c0_8 = arith.constant 0 : index
    %5 = vector.load %arg3[%c1, %c0_7, %c0_8] : memref<3x64x128xf32, #tpu.memory_space<vmem>>, vector<1x64x128xf32>
    %6 = vector.shape_cast %5 : vector<1x64x128xf32> to vector<64x128xf32>
    %c2 = arith.constant 2 : index
    %c0_9 = arith.constant 0 : index
    %c0_10 = arith.constant 0 : index
    %7 = vector.load %arg3[%c2, %c0_9, %c0_10] : memref<3x64x128xf32, #tpu.memory_space<vmem>>, vector<1x64x128xf32>
    %8 = vector.shape_cast %7 : vector<1x64x128xf32> to vector<64x128xf32>
    %c0_11 = arith.constant 0 : index
    %c0_12 = arith.constant 0 : index
    %c0_13 = arith.constant 0 : index
    %9 = vector.load %arg4[%c0_11, %c0_12, %c0_13] : memref<3x1x128xf32, #tpu.memory_space<vmem>>, vector<1x1x128xf32>
    %10 = vector.shape_cast %9 : vector<1x1x128xf32> to vector<1x128xf32>
    %c1_14 = arith.constant 1 : index
    %c0_15 = arith.constant 0 : index
    %c0_16 = arith.constant 0 : index
    %11 = vector.load %arg4[%c1_14, %c0_15, %c0_16] : memref<3x1x128xf32, #tpu.memory_space<vmem>>, vector<1x1x128xf32>
    %12 = vector.shape_cast %11 : vector<1x1x128xf32> to vector<1x128xf32>
    %c2_17 = arith.constant 2 : index
    %c0_18 = arith.constant 0 : index
    %c0_19 = arith.constant 0 : index
    %13 = vector.load %arg4[%c2_17, %c0_18, %c0_19] : memref<3x1x128xf32, #tpu.memory_space<vmem>>, vector<1x1x128xf32>
    %14 = vector.shape_cast %13 : vector<1x1x128xf32> to vector<1x128xf32>
    %c0_20 = arith.constant 0 : index
    %c0_21 = arith.constant 0 : index
    %c0_22 = arith.constant 0 : index
    %c0_23 = arith.constant 0 : index
    %15 = vector.load %arg7[%c0_20, %c0_21, %c0_22, %c0_23] : memref<2x3x128x128xf32, #tpu.memory_space<vmem>>, vector<1x1x128x128xf32>
    %16 = vector.shape_cast %15 : vector<1x1x128x128xf32> to vector<128x128xf32>
    %c0_24 = arith.constant 0 : index
    %c1_25 = arith.constant 1 : index
    %c0_26 = arith.constant 0 : index
    %c0_27 = arith.constant 0 : index
    %17 = vector.load %arg7[%c0_24, %c1_25, %c0_26, %c0_27] : memref<2x3x128x128xf32, #tpu.memory_space<vmem>>, vector<1x1x128x128xf32>
    %18 = vector.shape_cast %17 : vector<1x1x128x128xf32> to vector<128x128xf32>
    %c0_28 = arith.constant 0 : index
    %c2_29 = arith.constant 2 : index
    %c0_30 = arith.constant 0 : index
    %c0_31 = arith.constant 0 : index
    %19 = vector.load %arg7[%c0_28, %c2_29, %c0_30, %c0_31] : memref<2x3x128x128xf32, #tpu.memory_space<vmem>>, vector<1x1x128x128xf32>
    %20 = vector.shape_cast %19 : vector<1x1x128x128xf32> to vector<128x128xf32>
    %c0_32 = arith.constant 0 : index
    %c0_33 = arith.constant 0 : index
    %c0_34 = arith.constant 0 : index
    %c0_35 = arith.constant 0 : index
    %21 = vector.load %arg8[%c0_32, %c0_33, %c0_34, %c0_35] : memref<2x3x1x128xf32, #tpu.memory_space<vmem>>, vector<1x1x1x128xf32>
    %22 = vector.shape_cast %21 : vector<1x1x1x128xf32> to vector<1x128xf32>
    %c0_36 = arith.constant 0 : index
    %c1_37 = arith.constant 1 : index
    %c0_38 = arith.constant 0 : index
    %c0_39 = arith.constant 0 : index
    %23 = vector.load %arg8[%c0_36, %c1_37, %c0_38, %c0_39] : memref<2x3x1x128xf32, #tpu.memory_space<vmem>>, vector<1x1x1x128xf32>
    %24 = vector.shape_cast %23 : vector<1x1x1x128xf32> to vector<1x128xf32>
    %c0_40 = arith.constant 0 : index
    %c2_41 = arith.constant 2 : index
    %c0_42 = arith.constant 0 : index
    %c0_43 = arith.constant 0 : index
    %25 = vector.load %arg8[%c0_40, %c2_41, %c0_42, %c0_43] : memref<2x3x1x128xf32, #tpu.memory_space<vmem>>, vector<1x1x1x128xf32>
    %26 = vector.shape_cast %25 : vector<1x1x1x128xf32> to vector<1x128xf32>
    %cst = arith.constant dense<0.000000e+00> : vector<8x128xf32>
    %27 = tpu.matmul %0, %4, %cst {dimension_numbers = #tpu.dot_dimension_numbers<[1], [0], [0], [1], [0, 0, 1, 1], [], []>} : vector<8x64xf32>, vector<64x128xf32>, vector<8x128xf32> -> vector<8x128xf32>
    %28 = vector.broadcast %10 : vector<1x128xf32> to vector<8x128xf32>
    %29 = arith.addf %27, %28 : vector<8x128xf32>
    %cst_44 = arith.constant dense<0.000000e+00> : vector<8x128xf32>
    %30 = tpu.matmul %0, %6, %cst_44 {dimension_numbers = #tpu.dot_dimension_numbers<[1], [0], [0], [1], [0, 0, 1, 1], [], []>} : vector<8x64xf32>, vector<64x128xf32>, vector<8x128xf32> -> vector<8x128xf32>
    %31 = vector.broadcast %12 : vector<1x128xf32> to vector<8x128xf32>
    %32 = arith.addf %30, %31 : vector<8x128xf32>
    %cst_45 = arith.constant dense<0.000000e+00> : vector<8x128xf32>
    %33 = tpu.matmul %0, %8, %cst_45 {dimension_numbers = #tpu.dot_dimension_numbers<[1], [0], [0], [1], [0, 0, 1, 1], [], []>} : vector<8x64xf32>, vector<64x128xf32>, vector<8x128xf32> -> vector<8x128xf32>
    %34 = vector.broadcast %14 : vector<1x128xf32> to vector<8x128xf32>
    %35 = arith.addf %33, %34 : vector<8x128xf32>
    %cst_46 = arith.constant dense<0.000000e+00> : vector<8x128xf32>
    %36 = tpu.matmul %2, %16, %cst_46 {dimension_numbers = #tpu.dot_dimension_numbers<[1], [0], [0], [1], [0, 0, 1, 1], [], []>} : vector<8x128xf32>, vector<128x128xf32>, vector<8x128xf32> -> vector<8x128xf32>
    %37 = vector.broadcast %22 : vector<1x128xf32> to vector<8x128xf32>
    %38 = arith.addf %36, %37 : vector<8x128xf32>
    %cst_47 = arith.constant dense<0.000000e+00> : vector<8x128xf32>
    %39 = tpu.matmul %2, %18, %cst_47 {dimension_numbers = #tpu.dot_dimension_numbers<[1], [0], [0], [1], [0, 0, 1, 1], [], []>} : vector<8x128xf32>, vector<128x128xf32>, vector<8x128xf32> -> vector<8x128xf32>
    %40 = vector.broadcast %24 : vector<1x128xf32> to vector<8x128xf32>
    %41 = arith.addf %39, %40 : vector<8x128xf32>
    %cst_48 = arith.constant dense<0.000000e+00> : vector<8x128xf32>
    %42 = tpu.matmul %2, %20, %cst_48 {dimension_numbers = #tpu.dot_dimension_numbers<[1], [0], [0], [1], [0, 0, 1, 1], [], []>} : vector<8x128xf32>, vector<128x128xf32>, vector<8x128xf32> -> vector<8x128xf32>
    %43 = vector.broadcast %26 : vector<1x128xf32> to vector<8x128xf32>
    %44 = arith.addf %42, %43 : vector<8x128xf32>
    %45 = arith.addf %29, %38 : vector<8x128xf32>
    %46 = arith.negf %45 : vector<8x128xf32>
    %47 = math.exp %46 : vector<8x128xf32>
    %cst_49 = arith.constant 1.000000e+00 : f32
    %48 = vector.broadcast %cst_49 : f32 to vector<8x128xf32>
    %49 = arith.addf %48, %47 : vector<8x128xf32>
    %50 = arith.divf %48, %49 : vector<8x128xf32>
    %51 = arith.addf %32, %41 : vector<8x128xf32>
    %52 = arith.negf %51 : vector<8x128xf32>
    %53 = math.exp %52 : vector<8x128xf32>
    %cst_50 = arith.constant 1.000000e+00 : f32
    %54 = vector.broadcast %cst_50 : f32 to vector<8x128xf32>
    %55 = arith.addf %54, %53 : vector<8x128xf32>
    %56 = arith.divf %54, %55 : vector<8x128xf32>
    %57 = arith.mulf %50, %44 : vector<8x128xf32>
    %58 = arith.addf %35, %57 : vector<8x128xf32>
    %59 = math.tanh %58 : vector<8x128xf32>
    %cst_51 = arith.constant 1.000000e+00 : f32
    %60 = vector.broadcast %cst_51 : f32 to vector<8x128xf32>
    %61 = arith.subf %60, %56 : vector<8x128xf32>
    %62 = arith.mulf %61, %59 : vector<8x128xf32>
    %63 = arith.mulf %56, %2 : vector<8x128xf32>
    %64 = arith.addf %62, %63 : vector<8x128xf32>
    %c0_52 = arith.constant 0 : index
    %c0_53 = arith.constant 0 : index
    %c0_54 = arith.constant 0 : index
    %65 = vector.load %arg10[%c0_52, %c0_53, %c0_54] : memref<2x8x128xf32, #tpu.memory_space<vmem>>, vector<1x8x128xf32>
    %66 = vector.shape_cast %65 : vector<1x8x128xf32> to vector<8x128xf32>
    %67 = vector.shape_cast %64 : vector<8x128xf32> to vector<1x8x128xf32>
    tpu.vector_store %arg10[%c0_52, %c0_53, %c0_54], %67 {strides = array<i32>} : memref<2x8x128xf32, #tpu.memory_space<vmem>>, vector<1x8x128xf32>,
    %c1_55 = arith.constant 1 : index
    %c0_56 = arith.constant 0 : index
    %c0_57 = arith.constant 0 : index
    %68 = vector.load %arg2[%c1_55, %c0_56, %c0_57] : memref<2x8x128xf32, #tpu.memory_space<vmem>>, vector<1x8x128xf32>
    %69 = vector.shape_cast %68 : vector<1x8x128xf32> to vector<8x128xf32>
    %c0_58 = arith.constant 0 : index
    %c0_59 = arith.constant 0 : index
    %c0_60 = arith.constant 0 : index
    %c0_61 = arith.constant 0 : index
    %70 = vector.load %arg5[%c0_58, %c0_59, %c0_60, %c0_61] : memref<1x3x128x128xf32, #tpu.memory_space<vmem>>, vector<1x1x128x128xf32>
    %71 = vector.shape_cast %70 : vector<1x1x128x128xf32> to vector<128x128xf32>
    %c0_62 = arith.constant 0 : index
    %c1_63 = arith.constant 1 : index
    %c0_64 = arith.constant 0 : index
    %c0_65 = arith.constant 0 : index
    %72 = vector.load %arg5[%c0_62, %c1_63, %c0_64, %c0_65] : memref<1x3x128x128xf32, #tpu.memory_space<vmem>>, vector<1x1x128x128xf32>
    %73 = vector.shape_cast %72 : vector<1x1x128x128xf32> to vector<128x128xf32>
    %c0_66 = arith.constant 0 : index
    %c2_67 = arith.constant 2 : index
    %c0_68 = arith.constant 0 : index
    %c0_69 = arith.constant 0 : index
    %74 = vector.load %arg5[%c0_66, %c2_67, %c0_68, %c0_69] : memref<1x3x128x128xf32, #tpu.memory_space<vmem>>, vector<1x1x128x128xf32>
    %75 = vector.shape_cast %74 : vector<1x1x128x128xf32> to vector<128x128xf32>
    %c0_70 = arith.constant 0 : index
    %c0_71 = arith.constant 0 : index
    %c0_72 = arith.constant 0 : index
    %c0_73 = arith.constant 0 : index
    %76 = vector.load %arg6[%c0_70, %c0_71, %c0_72, %c0_73] : memref<1x3x1x128xf32, #tpu.memory_space<vmem>>, vector<1x1x1x128xf32>
    %77 = vector.shape_cast %76 : vector<1x1x1x128xf32> to vector<1x128xf32>
    %c0_74 = arith.constant 0 : index
    %c1_75 = arith.constant 1 : index
    %c0_76 = arith.constant 0 : index
    %c0_77 = arith.constant 0 : index
    %78 = vector.load %arg6[%c0_74, %c1_75, %c0_76, %c0_77] : memref<1x3x1x128xf32, #tpu.memory_space<vmem>>, vector<1x1x1x128xf32>
    %79 = vector.shape_cast %78 : vector<1x1x1x128xf32> to vector<1x128xf32>
    %c0_78 = arith.constant 0 : index
    %c2_79 = arith.constant 2 : index
    %c0_80 = arith.constant 0 : index
    %c0_81 = arith.constant 0 : index
    %80 = vector.load %arg6[%c0_78, %c2_79, %c0_80, %c0_81] : memref<1x3x1x128xf32, #tpu.memory_space<vmem>>, vector<1x1x1x128xf32>
    %81 = vector.shape_cast %80 : vector<1x1x1x128xf32> to vector<1x128xf32>
    %c1_82 = arith.constant 1 : index
    %c0_83 = arith.constant 0 : index
    %c0_84 = arith.constant 0 : index
    %c0_85 = arith.constant 0 : index
    %82 = vector.load %arg7[%c1_82, %c0_83, %c0_84, %c0_85] : memref<2x3x128x128xf32, #tpu.memory_space<vmem>>, vector<1x1x128x128xf32>
    %83 = vector.shape_cast %82 : vector<1x1x128x128xf32> to vector<128x128xf32>
    %c1_86 = arith.constant 1 : index
    %c1_87 = arith.constant 1 : index
    %c0_88 = arith.constant 0 : index
    %c0_89 = arith.constant 0 : index
    %84 = vector.load %arg7[%c1_86, %c1_87, %c0_88, %c0_89] : memref<2x3x128x128xf32, #tpu.memory_space<vmem>>, vector<1x1x128x128xf32>
    %85 = vector.shape_cast %84 : vector<1x1x128x128xf32> to vector<128x128xf32>
    %c1_90 = arith.constant 1 : index
    %c2_91 = arith.constant 2 : index
    %c0_92 = arith.constant 0 : index
    %c0_93 = arith.constant 0 : index
    %86 = vector.load %arg7[%c1_90, %c2_91, %c0_92, %c0_93] : memref<2x3x128x128xf32, #tpu.memory_space<vmem>>, vector<1x1x128x128xf32>
    %87 = vector.shape_cast %86 : vector<1x1x128x128xf32> to vector<128x128xf32>
    %c1_94 = arith.constant 1 : index
    %c0_95 = arith.constant 0 : index
    %c0_96 = arith.constant 0 : index
    %c0_97 = arith.constant 0 : index
    %88 = vector.load %arg8[%c1_94, %c0_95, %c0_96, %c0_97] : memref<2x3x1x128xf32, #tpu.memory_space<vmem>>, vector<1x1x1x128xf32>
    %89 = vector.shape_cast %88 : vector<1x1x1x128xf32> to vector<1x128xf32>
    %c1_98 = arith.constant 1 : index
    %c1_99 = arith.constant 1 : index
    %c0_100 = arith.constant 0 : index
    %c0_101 = arith.constant 0 : index
    %90 = vector.load %arg8[%c1_98, %c1_99, %c0_100, %c0_101] : memref<2x3x1x128xf32, #tpu.memory_space<vmem>>, vector<1x1x1x128xf32>
    %91 = vector.shape_cast %90 : vector<1x1x1x128xf32> to vector<1x128xf32>
    %c1_102 = arith.constant 1 : index
    %c2_103 = arith.constant 2 : index
    %c0_104 = arith.constant 0 : index
    %c0_105 = arith.constant 0 : index
    %92 = vector.load %arg8[%c1_102, %c2_103, %c0_104, %c0_105] : memref<2x3x1x128xf32, #tpu.memory_space<vmem>>, vector<1x1x1x128xf32>
    %93 = vector.shape_cast %92 : vector<1x1x1x128xf32> to vector<1x128xf32>
    %cst_106 = arith.constant dense<0.000000e+00> : vector<8x128xf32>
    %94 = tpu.matmul %64, %71, %cst_106 {dimension_numbers = #tpu.dot_dimension_numbers<[1], [0], [0], [1], [0, 0, 1, 1], [], []>} : vector<8x128xf32>, vector<128x128xf32>, vector<8x128xf32> -> vector<8x128xf32>
    %95 = vector.broadcast %77 : vector<1x128xf32> to vector<8x128xf32>
    %96 = arith.addf %94, %95 : vector<8x128xf32>
    %cst_107 = arith.constant dense<0.000000e+00> : vector<8x128xf32>
    %97 = tpu.matmul %64, %73, %cst_107 {dimension_numbers = #tpu.dot_dimension_numbers<[1], [0], [0], [1], [0, 0, 1, 1], [], []>} : vector<8x128xf32>, vector<128x128xf32>, vector<8x128xf32> -> vector<8x128xf32>
    %98 = vector.broadcast %79 : vector<1x128xf32> to vector<8x128xf32>
    %99 = arith.addf %97, %98 : vector<8x128xf32>
    %cst_108 = arith.constant dense<0.000000e+00> : vector<8x128xf32>
    %100 = tpu.matmul %64, %75, %cst_108 {dimension_numbers = #tpu.dot_dimension_numbers<[1], [0], [0], [1], [0, 0, 1, 1], [], []>} : vector<8x128xf32>, vector<128x128xf32>, vector<8x128xf32> -> vector<8x128xf32>
    %101 = vector.broadcast %81 : vector<1x128xf32> to vector<8x128xf32>
    %102 = arith.addf %100, %101 : vector<8x128xf32>
    %cst_109 = arith.constant dense<0.000000e+00> : vector<8x128xf32>
    %103 = tpu.matmul %69, %83, %cst_109 {dimension_numbers = #tpu.dot_dimension_numbers<[1], [0], [0], [1], [0, 0, 1, 1], [], []>} : vector<8x128xf32>, vector<128x128xf32>, vector<8x128xf32> -> vector<8x128xf32>
    %104 = vector.broadcast %89 : vector<1x128xf32> to vector<8x128xf32>
    %105 = arith.addf %103, %104 : vector<8x128xf32>
    %cst_110 = arith.constant dense<0.000000e+00> : vector<8x128xf32>
    %106 = tpu.matmul %69, %85, %cst_110 {dimension_numbers = #tpu.dot_dimension_numbers<[1], [0], [0], [1], [0, 0, 1, 1], [], []>} : vector<8x128xf32>, vector<128x128xf32>, vector<8x128xf32> -> vector<8x128xf32>
    %107 = vector.broadcast %91 : vector<1x128xf32> to vector<8x128xf32>
    %108 = arith.addf %106, %107 : vector<8x128xf32>
    %cst_111 = arith.constant dense<0.000000e+00> : vector<8x128xf32>
    %109 = tpu.matmul %69, %87, %cst_111 {dimension_numbers = #tpu.dot_dimension_numbers<[1], [0], [0], [1], [0, 0, 1, 1], [], []>} : vector<8x128xf32>, vector<128x128xf32>, vector<8x128xf32> -> vector<8x128xf32>
    %110 = vector.broadcast %93 : vector<1x128xf32> to vector<8x128xf32>
    %111 = arith.addf %109, %110 : vector<8x128xf32>
    %112 = arith.addf %96, %105 : vector<8x128xf32>
    %113 = arith.negf %112 : vector<8x128xf32>
    %114 = math.exp %113 : vector<8x128xf32>
    %cst_112 = arith.constant 1.000000e+00 : f32
    %115 = vector.broadcast %cst_112 : f32 to vector<8x128xf32>
    %116 = arith.addf %115, %114 : vector<8x128xf32>
    %117 = arith.divf %115, %116 : vector<8x128xf32>
    %118 = arith.addf %99, %108 : vector<8x128xf32>
    %119 = arith.negf %118 : vector<8x128xf32>
    %120 = math.exp %119 : vector<8x128xf32>
    %cst_113 = arith.constant 1.000000e+00 : f32
    %121 = vector.broadcast %cst_113 : f32 to vector<8x128xf32>
    %122 = arith.addf %121, %120 : vector<8x128xf32>
    %123 = arith.divf %121, %122 : vector<8x128xf32>
    %124 = arith.mulf %117, %111 : vector<8x128xf32>
    %125 = arith.addf %102, %124 : vector<8x128xf32>
    %126 = math.tanh %125 : vector<8x128xf32>
    %cst_114 = arith.constant 1.000000e+00 : f32
    %127 = vector.broadcast %cst_114 : f32 to vector<8x128xf32>
    %128 = arith.subf %127, %123 : vector<8x128xf32>
    %129 = arith.mulf %128, %126 : vector<8x128xf32>
    %130 = arith.mulf %123, %69 : vector<8x128xf32>
    %131 = arith.addf %129, %130 : vector<8x128xf32>
    %c1_115 = arith.constant 1 : index
    %c0_116 = arith.constant 0 : index
    %c0_117 = arith.constant 0 : index
    %132 = vector.load %arg10[%c1_115, %c0_116, %c0_117] : memref<2x8x128xf32, #tpu.memory_space<vmem>>, vector<1x8x128xf32>
    %133 = vector.shape_cast %132 : vector<1x8x128xf32> to vector<8x128xf32>
    %134 = vector.shape_cast %131 : vector<8x128xf32> to vector<1x8x128xf32>
    tpu.vector_store %arg10[%c1_115, %c0_116, %c0_117], %134 {strides = array<i32>} : memref<2x8x128xf32, #tpu.memory_space<vmem>>, vector<1x8x128xf32>,
    %c0_118 = arith.constant 0 : index
    %c0_119 = arith.constant 0 : index
    %135 = vector.load %arg9[%c0_118, %c0_119] : memref<8x128xf32, #tpu.memory_space<vmem>>, vector<8x128xf32>
    tpu.vector_store %arg9[%c0_118, %c0_119], %131 {strides = array<i32>} : memref<8x128xf32, #tpu.memory_space<vmem>>, vector<8x128xf32>,
    return
  }
  func.func @transform_0(%arg0: i32) -> (i32, i32) {
    %c0_i32 = arith.constant 0 : i32
    %c0_i32_0 = arith.constant 0 : i32
    return %arg0, %c0_i32 : i32, i32
  }
  func.func @transform_1(%arg0: i32) -> (i32, i32, i32) {
    %c0_i32 = arith.constant 0 : i32
    %c0_i32_0 = arith.constant 0 : i32
    %c0_i32_1 = arith.constant 0 : i32
    return %c0_i32, %arg0, %c0_i32_0 : i32, i32, i32
  }
  func.func @transform_2(%arg0: i32) -> (i32, i32, i32) {
    %c0_i32 = arith.constant 0 : i32
    %c0_i32_0 = arith.constant 0 : i32
    %c0_i32_1 = arith.constant 0 : i32
    %c0_i32_2 = arith.constant 0 : i32
    return %c0_i32, %c0_i32_0, %c0_i32_1 : i32, i32, i32
  }
  func.func @transform_3(%arg0: i32) -> (i32, i32, i32) {
    %c0_i32 = arith.constant 0 : i32
    %c0_i32_0 = arith.constant 0 : i32
    %c0_i32_1 = arith.constant 0 : i32
    %c0_i32_2 = arith.constant 0 : i32
    return %c0_i32, %c0_i32_0, %c0_i32_1 : i32, i32, i32
  }
  func.func @transform_4(%arg0: i32) -> (i32, i32, i32, i32) {
    %c0_i32 = arith.constant 0 : i32
    %c0_i32_0 = arith.constant 0 : i32
    %c0_i32_1 = arith.constant 0 : i32
    %c0_i32_2 = arith.constant 0 : i32
    %c0_i32_3 = arith.constant 0 : i32
    return %c0_i32, %c0_i32_0, %c0_i32_1, %c0_i32_2 : i32, i32, i32, i32
  }
  func.func @transform_5(%arg0: i32) -> (i32, i32, i32, i32) {
    %c0_i32 = arith.constant 0 : i32
    %c0_i32_0 = arith.constant 0 : i32
    %c0_i32_1 = arith.constant 0 : i32
    %c0_i32_2 = arith.constant 0 : i32
    %c0_i32_3 = arith.constant 0 : i32
    return %c0_i32, %c0_i32_0, %c0_i32_1, %c0_i32_2 : i32, i32, i32, i32
  }
  func.func @transform_6(%arg0: i32) -> (i32, i32, i32, i32) {
    %c0_i32 = arith.constant 0 : i32
    %c0_i32_0 = arith.constant 0 : i32
    %c0_i32_1 = arith.constant 0 : i32
    %c0_i32_2 = arith.constant 0 : i32
    %c0_i32_3 = arith.constant 0 : i32
    return %c0_i32, %c0_i32_0, %c0_i32_1, %c0_i32_2 : i32, i32, i32, i32
  }
  func.func @transform_7(%arg0: i32) -> (i32, i32, i32, i32) {
    %c0_i32 = arith.constant 0 : i32
    %c0_i32_0 = arith.constant 0 : i32
    %c0_i32_1 = arith.constant 0 : i32
    %c0_i32_2 = arith.constant 0 : i32
    %c0_i32_3 = arith.constant 0 : i32
    return %c0_i32, %c0_i32_0, %c0_i32_1, %c0_i32_2 : i32, i32, i32, i32
  }
  func.func @transform_8(%arg0: i32) -> (i32, i32) {
    %c0_i32 = arith.constant 0 : i32
    %c0_i32_0 = arith.constant 0 : i32
    return %arg0, %c0_i32 : i32, i32
  }
  func.func @transform_9(%arg0: i32) -> (i32, i32, i32) {
    %c0_i32 = arith.constant 0 : i32
    %c0_i32_0 = arith.constant 0 : i32
    %c0_i32_1 = arith.constant 0 : i32
    return %c0_i32, %arg0, %c0_i32_0 : i32, i32, i32
  }
}

</mosaic_0001>

<llo_original>
// kernel: tpu_custom_call.1
$region0: #{tpu_custom_call.1}
  #allocation0 [shape = 'u32[]', space=smem, size = 0x4, offset = 0x4, fixed_abs, tag = 'smem constant byte address 0x4 - core index']
  #allocation1 [shape = 'u32[144,128]{1,0:T(1,128)}', space=vmem, size = 0x12000, scoped, tag = 'internal scratch']
  %s0 = inlined_call_operand.hbm [shape: f32[16,64], index: 0, kind: input, shape index: {}]
  %s1 = inlined_call_operand.hbm [shape: f32[2,16,128], index: 1, kind: input, shape index: {}]
  %s2 = inlined_call_operand.hbm [shape: f32[3,64,128], index: 2, kind: input, shape index: {}]
  %s3 = inlined_call_operand.vmem [shape: f32[3,1,128], index: 3, kind: input, shape index: {}]
  %s4 = inlined_call_operand.hbm [shape: f32[1,3,128,128], index: 4, kind: input, shape index: {}]
  %s5 = inlined_call_operand.vmem [shape: f32[1,3,1,128], index: 5, kind: input, shape index: {}]
  %s6 = inlined_call_operand.hbm [shape: f32[2,3,128,128], index: 6, kind: input, shape index: {}]
  %s7 = inlined_call_operand.vmem [shape: f32[2,3,1,128], index: 7, kind: input, shape index: {}]
  %s8 = inlined_call_operand.hbm [shape: f32[16,128], index: 8, kind: output, shape index: {0}]
  %s9 = inlined_call_operand.hbm [shape: f32[2,16,128], index: 9, kind: output, shape index: {1}]
  %10 = xla_tuple %s8, %s9
  %s11 = sld [smem:[#allocation0]]
  $region93: #{tpu_custom_call.1} parent=0
    _
  %s13 = ssub.s32 1, %s11
  %s14 = scalar_select 0, %s13, %s11
  $region1: #{tpu_custom_call.1} parent=0
    #allocation2 [shape = 'u8[8192]{0}', space=vmem, size = 0x2000, scoped, tag = 'input window, operand 0']
    #allocation3 [shape = 's32[2]{0}', space=sflag, size = 0x8, scoped, tag = 'scoped memory for tpu_custom_call.1']
    #allocation4 [shape = 's32[2]{0}', space=sflag, size = 0x8, scoped, tag = 'scoped memory for tpu_custom_call.1']
    #allocation5 [shape = 'u8[16384]{0}', space=vmem, size = 0x4000, scoped, tag = 'input window, operand 1']
    #allocation6 [shape = 's32[2]{0}', space=sflag, size = 0x8, scoped, tag = 'scoped memory for tpu_custom_call.1']
    #allocation7 [shape = 'u8[98304]{0}', space=vmem, size = 0x18000, scoped, tag = 'input window, operand 2, single buffered']
    #allocation8 [shape = 'u8[196608]{0}', space=vmem, size = 0x30000, scoped, tag = 'input window, operand 4, single buffered']
    #allocation9 [shape = 's32[1]{0}', space=sflag, size = 0x4, scoped, tag = 'scoped memory for tpu_custom_call.1']
    #allocation10 [shape = 'u8[393216]{0}', space=vmem, size = 0x60000, scoped, tag = 'input window, operand 6, single buffered']
    #allocation11 [shape = 'u8[8192]{0}', space=vmem, size = 0x2000, scoped, tag = 'output window, operand 0']
    #allocation12 [shape = 'u8[16384]{0}', space=vmem, size = 0x4000, scoped, tag = 'output window, operand 1']
    #allocation13 [shape = 's32[2]{0}', space=sflag, size = 0x8, scoped, tag = 'scoped memory for tpu_custom_call.1']
    %15 = vsyncpa [#allocation3], 0
    %s16 = scalar_lea.sflag [#allocation3], 1
    %17 = vsyncpa %s16, 0
    %18 = vsyncpa [#allocation6], 0
    %s19 = scalar_lea.sflag [#allocation6], 1
    %20 = vsyncpa %s19, 0
    %21 = vsyncpa [#allocation9], 0
    %22 = vsyncpa [#allocation4], 0
    %s23 = scalar_lea.sflag [#allocation4], 1
    %24 = vsyncpa %s23, 0
    %25 = vsyncpa [#allocation13], 0
    %s26 = scalar_lea.sflag [#allocation13], 1
    %27 = vsyncpa %s26, 0
    loop: start=0, step=1, limit=4
    $region2: #{tpu_custom_call.1} parent=1 // loop_pre_header
      _
    $region3: #{tpu_custom_call.1} parent=1 // loop_header
      %s29 = sphi 0, %s33
      %p30 = scmp.ge.s32.totalorder %s29, 4
      %s39 = sphi 0, %s41
      %s42 = sphi 0, %s39
      %s43 = sphi 0, %s42
      %s59 = sphi 0, %s43
      %s65 = sphi 0, %s67
      %s68 = sphi 0, %s65
      %s69 = sphi 0, %s68
      %s85 = sphi 0, %s69
      %s89 = sphi 0, %s89
      %s91 = sphi 0, %s89
      %s92 = sphi 0, %s91
      %s106 = sphi 0, %s92
      %s110 = sphi 0, %s110
      %s112 = sphi 0, %s110
      %s113 = sphi 0, %s112
      %s127 = sphi 0, %s113
      %s131 = sphi 0, %s131
      %s133 = sphi 0, %s131
      %s134 = sphi 0, %s133
      %s148 = sphi 0, %s134
      %s152 = sphi 0, %s152
      %s154 = sphi 0, %s152
      %s155 = sphi 0, %s154
      %s169 = sphi 0, %s155
      %s173 = sphi 0, %s173
      %s175 = sphi 0, %s173
      %s176 = sphi 0, %s175
      %s190 = sphi 0, %s176
      %s194 = sphi 0, %s194
      %s196 = sphi 0, %s194
      %s197 = sphi 0, %s196
      %s211 = sphi 0, %s197
      %s217 = sphi 0, %s219
      %s220 = sphi 0, %s217
      %s221 = sphi 0, %s220
      %s237 = sphi 0, %s221
      %s243 = sphi 0, %s245
      %s246 = sphi 0, %s243
      %s247 = sphi 0, %s246
      %s263 = sphi 0, %s247
    $region4: #{tpu_custom_call.1} parent=1 // loop_header_branch
      %32 = sbr.rel (%p30) target = $region8
    $region5: #{tpu_custom_call.1} parent=1 // loop_body
      %s34 = ssub.s32 %s29, 1
      %s35 = ssub.s32 %s29, 2
      %s36 = sadd.s32 %s29, 1
      %s37 = ssub.s32 %s29, %s36
      %p38 = scmp.eq.s32.totalorder %s37, 0
      %s40 = sadd.s32 %s39, 1
      %s41 = scalar_select %p38, %s39, %s40
      %p44 = pneg %p38
      %p45 = scmp.eq.s32.totalorder %s29, 1
      %p46 = por %p44, %p45
      %p47 = scmp.ne.s32.totalorder %s39, %s42
      %p48 = scmp.eq.s32.totalorder %s29, 0
      %p49 = por %p47, %p48
      %p50 = scmp.ne.s32.totalorder %s39, %s42
      %p51 = scmp.eq.s32.totalorder %s34, 1
      %p52 = por %p50, %p51
      %p53 = scmp.ne.s32.totalorder %s42, %s43
      %p54 = scmp.eq.s32.totalorder %s34, 0
      %p55 = por %p53, %p54
      %p56 = scmp.ne.s32.totalorder %s42, %s43
      %p57 = scmp.eq.s32.totalorder %s35, 1
      %p58 = por %p56, %p57
      %p60 = scmp.ne.s32.totalorder %s43, %s59
      %p61 = scmp.eq.s32.totalorder %s35, 0
      %p62 = por %p60, %p61
      %s63 = ssub.s32 %s29, %s36
      %p64 = scmp.eq.s32.totalorder %s63, 0
      %s66 = sadd.s32 %s65, 1
      %s67 = scalar_select %p64, %s65, %s66
      %p70 = pneg %p64
      %p71 = scmp.eq.s32.totalorder %s29, 1
      %p72 = por %p70, %p71
      %p73 = scmp.ne.s32.totalorder %s65, %s68
      %p74 = scmp.eq.s32.totalorder %s29, 0
      %p75 = por %p73, %p74
      %p76 = scmp.ne.s32.totalorder %s65, %s68
      %p77 = scmp.eq.s32.totalorder %s34, 1
      %p78 = por %p76, %p77
      %p79 = scmp.ne.s32.totalorder %s68, %s69
      %p80 = scmp.eq.s32.totalorder %s34, 0
      %p81 = por %p79, %p80
      %p82 = scmp.ne.s32.totalorder %s68, %s69
      %p83 = scmp.eq.s32.totalorder %s35, 1
      %p84 = por %p82, %p83
      %p86 = scmp.ne.s32.totalorder %s69, %s85
      %p87 = scmp.eq.s32.totalorder %s35, 0
      %p88 = por %p86, %p87
      %s90 = sadd.s32 %s89, 1
      %p93 = scmp.eq.s32.totalorder %s29, 1
      %p94 = scmp.ne.s32.totalorder %s89, %s91
      %p95 = scmp.eq.s32.totalorder %s29, 0
      %p96 = por %p94, %p95
      %p97 = scmp.ne.s32.totalorder %s89, %s91
      %p98 = scmp.eq.s32.totalorder %s34, 1
      %p99 = por %p97, %p98
      %p100 = scmp.ne.s32.totalorder %s91, %s92
      %p101 = scmp.eq.s32.totalorder %s34, 0
      %p102 = por %p100, %p101
      %p103 = scmp.ne.s32.totalorder %s91, %s92
      %p104 = scmp.eq.s32.totalorder %s35, 1
      %p105 = por %p103, %p104
      %p107 = scmp.ne.s32.totalorder %s92, %s106
      %p108 = scmp.eq.s32.totalorder %s35, 0
      %p109 = por %p107, %p108
      %s111 = sadd.s32 %s110, 1
      %p114 = scmp.eq.s32.totalorder %s29, 1
      %p115 = scmp.ne.s32.totalorder %s110, %s112
      %p116 = scmp.eq.s32.totalorder %s29, 0
      %p117 = por %p115, %p116
      %p118 = scmp.ne.s32.totalorder %s110, %s112
      %p119 = scmp.eq.s32.totalorder %s34, 1
      %p120 = por %p118, %p119
      %p121 = scmp.ne.s32.totalorder %s112, %s113
      %p122 = scmp.eq.s32.totalorder %s34, 0
      %p123 = por %p121, %p122
      %p124 = scmp.ne.s32.totalorder %s112, %s113
      %p125 = scmp.eq.s32.totalorder %s35, 1
      %p126 = por %p124, %p125
      %p128 = scmp.ne.s32.totalorder %s113, %s127
      %p129 = scmp.eq.s32.totalorder %s35, 0
      %p130 = por %p128, %p129
      %s132 = sadd.s32 %s131, 1
      %p135 = scmp.eq.s32.totalorder %s29, 1
      %p136 = scmp.ne.s32.totalorder %s131, %s133
      %p137 = scmp.eq.s32.totalorder %s29, 0
      %p138 = por %p136, %p137
      %p139 = scmp.ne.s32.totalorder %s131, %s133
      %p140 = scmp.eq.s32.totalorder %s34, 1
      %p141 = por %p139, %p140
      %p142 = scmp.ne.s32.totalorder %s133, %s134
      %p143 = scmp.eq.s32.totalorder %s34, 0
      %p144 = por %p142, %p143
      %p145 = scmp.ne.s32.totalorder %s133, %s134
      %p146 = scmp.eq.s32.totalorder %s35, 1
      %p147 = por %p145, %p146
      %p149 = scmp.ne.s32.totalorder %s134, %s148
      %p150 = scmp.eq.s32.totalorder %s35, 0
      %p151 = por %p149, %p150
      %s153 = sadd.s32 %s152, 1
      %p156 = scmp.eq.s32.totalorder %s29, 1
      %p157 = scmp.ne.s32.totalorder %s152, %s154
      %p158 = scmp.eq.s32.totalorder %s29, 0
      %p159 = por %p157, %p158
      %p160 = scmp.ne.s32.totalorder %s152, %s154
      %p161 = scmp.eq.s32.totalorder %s34, 1
      %p162 = por %p160, %p161
      %p163 = scmp.ne.s32.totalorder %s154, %s155
      %p164 = scmp.eq.s32.totalorder %s34, 0
      %p165 = por %p163, %p164
      %p166 = scmp.ne.s32.totalorder %s154, %s155
      %p167 = scmp.eq.s32.totalorder %s35, 1
      %p168 = por %p166, %p167
      %p170 = scmp.ne.s32.totalorder %s155, %s169
      %p171 = scmp.eq.s32.totalorder %s35, 0
      %p172 = por %p170, %p171
      %s174 = sadd.s32 %s173, 1
      %p177 = scmp.eq.s32.totalorder %s29, 1
      %p178 = scmp.ne.s32.totalorder %s173, %s175
      %p179 = scmp.eq.s32.totalorder %s29, 0
      %p180 = por %p178, %p179
      %p181 = scmp.ne.s32.totalorder %s173, %s175
      %p182 = scmp.eq.s32.totalorder %s34, 1
      %p183 = por %p181, %p182
      %p184 = scmp.ne.s32.totalorder %s175, %s176
      %p185 = scmp.eq.s32.totalorder %s34, 0
      %p186 = por %p184, %p185
      %p187 = scmp.ne.s32.totalorder %s175, %s176
      %p188 = scmp.eq.s32.totalorder %s35, 1
      %p189 = por %p187, %p188
      %p191 = scmp.ne.s32.totalorder %s176, %s190
      %p192 = scmp.eq.s32.totalorder %s35, 0
      %p193 = por %p191, %p192
      %s195 = sadd.s32 %s194, 1
      %p198 = scmp.eq.s32.totalorder %s29, 1
      %p199 = scmp.ne.s32.totalorder %s194, %s196
      %p200 = scmp.eq.s32.totalorder %s29, 0
      %p201 = por %p199, %p200
      %p202 = scmp.ne.s32.totalorder %s194, %s196
      %p203 = scmp.eq.s32.totalorder %s34, 1
      %p204 = por %p202, %p203
      %p205 = scmp.ne.s32.totalorder %s196, %s197
      %p206 = scmp.eq.s32.totalorder %s34, 0
      %p207 = por %p205, %p206
      %p208 = scmp.ne.s32.totalorder %s196, %s197
      %p209 = scmp.eq.s32.totalorder %s35, 1
      %p210 = por %p208, %p209
      %p212 = scmp.ne.s32.totalorder %s197, %s211
      %p213 = scmp.eq.s32.totalorder %s35, 0
      %p214 = por %p212, %p213
      %s215 = ssub.s32 %s29, %s36
      %p216 = scmp.eq.s32.totalorder %s215, 0
      %s218 = sadd.s32 %s217, 1
      %s219 = scalar_select %p216, %s217, %s218
      %p222 = pneg %p216
      %p223 = scmp.eq.s32.totalorder %s29, 1
      %p224 = por %p222, %p223
      %p225 = scmp.ne.s32.totalorder %s217, %s220
      %p226 = scmp.eq.s32.totalorder %s29, 0
      %p227 = por %p225, %p226
      %p228 = scmp.ne.s32.totalorder %s217, %s220
      %p229 = scmp.eq.s32.totalorder %s34, 1
      %p230 = por %p228, %p229
      %p231 = scmp.ne.s32.totalorder %s220, %s221
      %p232 = scmp.eq.s32.totalorder %s34, 0
      %p233 = por %p231, %p232
      %p234 = scmp.ne.s32.totalorder %s220, %s221
      %p235 = scmp.eq.s32.totalorder %s35, 1
      %p236 = por %p234, %p235
      %p238 = scmp.ne.s32.totalorder %s221, %s237
      %p239 = scmp.eq.s32.totalorder %s35, 0
      %p240 = por %p238, %p239
      %s241 = ssub.s32 %s29, %s36
      %p242 = scmp.eq.s32.totalorder %s241, 0
      %s244 = sadd.s32 %s243, 1
      %s245 = scalar_select %p242, %s243, %s244
      %p248 = pneg %p242
      %p249 = scmp.eq.s32.totalorder %s29, 1
      %p250 = por %p248, %p249
      %p251 = scmp.ne.s32.totalorder %s243, %s246
      %p252 = scmp.eq.s32.totalorder %s29, 0
      %p253 = por %p251, %p252
      %p254 = scmp.ne.s32.totalorder %s243, %s246
      %p255 = scmp.eq.s32.totalorder %s34, 1
      %p256 = por %p254, %p255
      %p257 = scmp.ne.s32.totalorder %s246, %s247
      %p258 = scmp.eq.s32.totalorder %s34, 0
      %p259 = por %p257, %p258
      %p260 = scmp.ne.s32.totalorder %s246, %s247
      %p261 = scmp.eq.s32.totalorder %s35, 1
      %p262 = por %p260, %p261
      %p264 = scmp.ne.s32.totalorder %s247, %s263
      %p265 = scmp.eq.s32.totalorder %s35, 0
      %p266 = por %p264, %p265
      %p267 = scmp.le.s32.totalorder 1, %s29
      %p268 = scmp.lt.s32.totalorder %s29, 3
      %p269 = pnand %p267, %p268
      %p270 = pneg %p269
      // Predicated region
      $region9: #{tpu_custom_call.1} parent=5 // pred_check
        _
      $region10: #{tpu_custom_call.1} parent=5 // pred_check_branch
        %272 = sbr.rel (%p269) target = $region12
      $region11: #{tpu_custom_call.1} parent=5 // pred_region
        %s273 = ssub.s32 %s29, 1
        // Predicated region
        $region13: #{tpu_custom_call.1} parent=11 // pred_check
          %p274 = pneg %p102
        $region14: #{tpu_custom_call.1} parent=11 // pred_check_branch
          %276 = sbr.rel (%p274) target = $region16
        $region15: #{tpu_custom_call.1} parent=11 // pred_region
          %s278 = ssub.s32 3072, 3072
          %279 = vsyncadd [#allocation6], %s278
          %s280 = sshll.u32 [#allocation7], 4
          %s281 = int_to_ptr.vmem [resolvable:$true] %s280
          %286 = dma.hbm_to_vmem [thread:$0]  %s2, 3072, %s281, [#allocation6], 128, 128, 8
        $region16: #{tpu_custom_call.1} parent=11 // pred_fallthru
          _
        // Predicated region
        $region17: #{tpu_custom_call.1} parent=11 // pred_check
          %p287 = pneg %p123
        $region18: #{tpu_custom_call.1} parent=11 // pred_check_branch
          %289 = sbr.rel (%p287) target = $region20
        $region19: #{tpu_custom_call.1} parent=11 // pred_region
          _
        $region20: #{tpu_custom_call.1} parent=11 // pred_fallthru
          _
        // Predicated region
        $region21: #{tpu_custom_call.1} parent=11 // pred_check
          %p290 = pneg %p144
        $region22: #{tpu_custom_call.1} parent=11 // pred_check_branch
          %292 = sbr.rel (%p290) target = $region24
        $region23: #{tpu_custom_call.1} parent=11 // pred_region
          %s294 = ssub.s32 6144, 6144
          %295 = vsyncadd [#allocation9], %s294
          %s296 = sshll.u32 [#allocation8], 4
          %s297 = int_to_ptr.vmem [resolvable:$true] %s296
          %302 = dma.hbm_to_vmem [thread:$0]  %s4, 6144, %s297, [#allocation9], 128, 128, 8
        $region24: #{tpu_custom_call.1} parent=11 // pred_fallthru
          _
        // Predicated region
        $region25: #{tpu_custom_call.1} parent=11 // pred_check
          %p303 = pneg %p165
        $region26: #{tpu_custom_call.1} parent=11 // pred_check_branch
          %305 = sbr.rel (%p303) target = $region28
        $region27: #{tpu_custom_call.1} parent=11 // pred_region
          _
        $region28: #{tpu_custom_call.1} parent=11 // pred_fallthru
          _
        // Predicated region
        $region29: #{tpu_custom_call.1} parent=11 // pred_check
          %p306 = pneg %p186
        $region30: #{tpu_custom_call.1} parent=11 // pred_check_branch
          %308 = sbr.rel (%p306) target = $region32
        $region31: #{tpu_custom_call.1} parent=11 // pred_region
          %s310 = ssub.s32 12288, 12288
          %311 = vsyncadd [#allocation9], %s310
          %s312 = sshll.u32 [#allocation10], 4
          %s313 = int_to_ptr.vmem [resolvable:$true] %s312
          %318 = dma.hbm_to_vmem [thread:$0]  %s6, 12288, %s313, [#allocation9], 128, 128, 8
        $region32: #{tpu_custom_call.1} parent=11 // pred_fallthru
          _
        // Predicated region
        $region33: #{tpu_custom_call.1} parent=11 // pred_check
          %p319 = pneg %p207
        $region34: #{tpu_custom_call.1} parent=11 // pred_check_branch
          %321 = sbr.rel (%p319) target = $region36
        $region35: #{tpu_custom_call.1} parent=11 // pred_region
          _
        $region36: #{tpu_custom_call.1} parent=11 // pred_fallthru
          _
      $region12: #{tpu_custom_call.1} parent=5 // pred_fallthru
        _
      %p322 = scmp.lt.s32.totalorder %s29, 2
      // Predicated region
      $region37: #{tpu_custom_call.1} parent=5 // pred_check
        %p323 = pneg %p322
      $region38: #{tpu_custom_call.1} parent=5 // pred_check_branch
        %325 = sbr.rel (%p323) target = $region40
      $region39: #{tpu_custom_call.1} parent=5 // pred_region
        // Predicated region
        $region41: #{tpu_custom_call.1} parent=39 // pred_check
          %p326 = pneg %p49
        $region42: #{tpu_custom_call.1} parent=39 // pred_check_branch
          %328 = sbr.rel (%p326) target = $region44
        $region43: #{tpu_custom_call.1} parent=39 // pred_region
          %s329 = sand.u32 %s39, 1
          %s330 = scalar_lea.sflag [#allocation3], %s329
          %s331 = sand.u32 %s39, 1
          %s332 = smul.addr %s331, 8
          %s333 = scalar_lea.vmem [#allocation2], %s332
          %s335 = ssub.s32 128, 128
          %336 = vsyncadd %s330, %s335
          %s337 = smul.addr %s29, 128
          %s338 = scalar_lea.hbm %s0, %s337
          %s340 = sshll.u32 %s333, 4
          %s341 = int_to_ptr.vmem [resolvable:$true] %s340
          %343 = dma.hbm_to_vmem [thread:$0]  %s338, 128, %s341, %s330
        $region44: #{tpu_custom_call.1} parent=39 // pred_fallthru
          _
        // Predicated region
        $region45: #{tpu_custom_call.1} parent=39 // pred_check
          %p344 = pneg %p75
        $region46: #{tpu_custom_call.1} parent=39 // pred_check_branch
          %346 = sbr.rel (%p344) target = $region48
        $region47: #{tpu_custom_call.1} parent=39 // pred_region
          %s347 = sand.u32 %s29, 1
          %s348 = scalar_lea.sflag [#allocation6], %s347
          %s349 = sand.u32 %s65, 1
          %s350 = smul.addr %s349, 16
          %s351 = scalar_lea.vmem [#allocation5], %s350
          %s353 = ssub.s32 256, 256
          %354 = vsyncadd %s348, %s353
          %s355 = smul.addr %s29, 128
          %s356 = scalar_lea.hbm %s1, %s355
          %s357 = sshll.u32 %s351, 4
          %s358 = int_to_ptr.vmem [resolvable:$true] %s357
          %363 = dma.hbm_to_vmem [thread:$0]  %s356, 256, %s358, %s348, 256, 128, 8
        $region48: #{tpu_custom_call.1} parent=39 // pred_fallthru
          _
      $region40: #{tpu_custom_call.1} parent=5 // pred_fallthru
        _
      %p364 = scmp.le.s32.totalorder 1, %s29
      %p365 = scmp.lt.s32.totalorder %s29, 3
      %p366 = pnand %p364, %p365
      %p367 = pneg %p366
      // Predicated region
      $region49: #{tpu_custom_call.1} parent=5 // pred_check
        _
      $region50: #{tpu_custom_call.1} parent=5 // pred_check_branch
        %369 = sbr.rel (%p366) target = $region52
      $region51: #{tpu_custom_call.1} parent=5 // pred_region
        %s370 = ssub.s32 %s29, 1
        %s371 = sand.u32 %s42, 1
        %s372 = scalar_lea.sflag [#allocation3], %s371
        %s373 = sand.u32 %s42, 1
        %s374 = smul.addr %s373, 8
        %s375 = scalar_lea.vmem [#allocation2], %s374
        // Predicated region
        $region53: #{tpu_custom_call.1} parent=51 // pred_check
          %p376 = pneg %p55
        $region54: #{tpu_custom_call.1} parent=51 // pred_check_branch
          %378 = sbr.rel (%p376) target = $region56
        $region55: #{tpu_custom_call.1} parent=51 // pred_region
          %379 = dma.done %s372, 128
        $region56: #{tpu_custom_call.1} parent=51 // pred_fallthru
          _
        %s380 = sand.u32 %s34, 1
        %s381 = scalar_lea.sflag [#allocation6], %s380
        %s382 = sand.u32 %s68, 1
        %s383 = smul.addr %s382, 16
        %s384 = scalar_lea.vmem [#allocation5], %s383
        // Predicated region
        $region57: #{tpu_custom_call.1} parent=51 // pred_check
          %p385 = pneg %p81
        $region58: #{tpu_custom_call.1} parent=51 // pred_check_branch
          %387 = sbr.rel (%p385) target = $region60
        $region59: #{tpu_custom_call.1} parent=51 // pred_region
          %388 = dma.done %s381, 256
        $region60: #{tpu_custom_call.1} parent=51 // pred_fallthru
          _
        // Predicated region
        $region61: #{tpu_custom_call.1} parent=51 // pred_check
          %p389 = pneg %p102
        $region62: #{tpu_custom_call.1} parent=51 // pred_check_branch
          %391 = sbr.rel (%p389) target = $region64
        $region63: #{tpu_custom_call.1} parent=51 // pred_region
          %392 = dma.done [#allocation6], 3072
        $region64: #{tpu_custom_call.1} parent=51 // pred_fallthru
          _
        // Predicated region
        $region65: #{tpu_custom_call.1} parent=51 // pred_check
          %p393 = pneg %p144
        $region66: #{tpu_custom_call.1} parent=51 // pred_check_branch
          %395 = sbr.rel (%p393) target = $region68
        $region67: #{tpu_custom_call.1} parent=51 // pred_region
          %396 = dma.done [#allocation9], 6144
        $region68: #{tpu_custom_call.1} parent=51 // pred_fallthru
          _
        // Predicated region
        $region69: #{tpu_custom_call.1} parent=51 // pred_check
          %p397 = pneg %p186
        $region70: #{tpu_custom_call.1} parent=51 // pred_check_branch
          %399 = sbr.rel (%p397) target = $region72
        $region71: #{tpu_custom_call.1} parent=51 // pred_region
          %400 = dma.done [#allocation9], 12288
        $region72: #{tpu_custom_call.1} parent=51 // pred_fallthru
          _
        %s401 = sand.u32 %s42, 1
        %s402 = scalar_lea.sflag [#allocation3], %s401
        %s403 = sand.u32 %s42, 1
        %s404 = smul.addr %s403, 8
        %s405 = scalar_lea.vmem [#allocation2], %s404
        %p406 = pneg %p55
        %p407 = pneg %p52
        %s408 = sand.u32 %s34, 1
        %s409 = scalar_lea.sflag [#allocation6], %s408
        %s410 = sand.u32 %s68, 1
        %s411 = smul.addr %s410, 16
        %s412 = scalar_lea.vmem [#allocation5], %s411
        %p413 = pneg %p81
        %p414 = pneg %p78
        %p415 = pneg %p102
        %p416 = pneg %p99
        %p417 = pneg %p123
        %p418 = pneg %p120
        %p419 = pneg %p144
        %p420 = pneg %p141
        %p421 = pneg %p165
        %p422 = pneg %p162
        %p423 = pneg %p186
        %p424 = pneg %p183
        %p425 = pneg %p207
        %p426 = pneg %p204
        %p427 = pneg %p233
        %p428 = pneg %p230
        %s429 = sand.u32 %s220, 1
        %s430 = scalar_lea.sflag [#allocation4], %s429
        %s431 = sand.u32 %s220, 1
        %s432 = smul.addr %s431, 8
        %s433 = scalar_lea.vmem [#allocation11], %s432
        %p434 = pneg %p259
        %p435 = pneg %p256
        %s436 = sand.u32 %s246, 1
        %s437 = scalar_lea.sflag [#allocation13], %s436
        %s438 = sand.u32 %s246, 1
        %s439 = smul.addr %s438, 16
        %s440 = scalar_lea.vmem [#allocation12], %s439
        %v441 = vld [vmem:[%s375] sm:$0xff]
        %v442 = vld [vmem:[%s384] sm:$0xff]
        %v443 = vld [vmem:[#allocation7] sm:$0xff]
        %v444 = vld [vmem:[#allocation7 + $0x8] sm:$0xff]
        %v445 = vld [vmem:[#allocation7 + $0x10] sm:$0xff]
        %v446 = vld [vmem:[#allocation7 + $0x18] sm:$0xff]
        %v447 = vld [vmem:[#allocation7 + $0x20] sm:$0xff]
        %v448 = vld [vmem:[#allocation7 + $0x28] sm:$0xff]
        %v449 = vld [vmem:[#allocation7 + $0x30] sm:$0xff]
        %v450 = vld [vmem:[#allocation7 + $0x38] sm:$0xff]
        %s451 = scalar_lea.vmem [#allocation7], 64
        %v452 = vld [vmem:[%s451] sm:$0xff]
        %v453 = vld [vmem:[%s451 + $0x8] sm:$0xff]
        %v454 = vld [vmem:[%s451 + $0x10] sm:$0xff]
        %v455 = vld [vmem:[%s451 + $0x18] sm:$0xff]
        %v456 = vld [vmem:[%s451 + $0x20] sm:$0xff]
        %v457 = vld [vmem:[%s451 + $0x28] sm:$0xff]
        %v458 = vld [vmem:[%s451 + $0x30] sm:$0xff]
        %v459 = vld [vmem:[%s451 + $0x38] sm:$0xff]
        %s460 = scalar_lea.vmem [#allocation7], 128
        %v461 = vld [vmem:[%s460] sm:$0xff]
        %v462 = vld [vmem:[%s460 + $0x8] sm:$0xff]
        %v463 = vld [vmem:[%s460 + $0x10] sm:$0xff]
        %v464 = vld [vmem:[%s460 + $0x18] sm:$0xff]
        %v465 = vld [vmem:[%s460 + $0x20] sm:$0xff]
        %v466 = vld [vmem:[%s460 + $0x28] sm:$0xff]
        %v467 = vld [vmem:[%s460 + $0x30] sm:$0xff]
        %v468 = vld [vmem:[%s460 + $0x38] sm:$0xff]
        %v469 = vld [vmem:[%s3] sm:$0x1]
        %s470 = scalar_lea.vmem %s3, 1
        %v471 = vld [vmem:[%s470] sm:$0x1]
        %s472 = scalar_lea.vmem %s3, 2
        %v473 = vld [vmem:[%s472] sm:$0x1]
        %v474 = vld [vmem:[#allocation10] sm:$0xff]
        %v475 = vld [vmem:[#allocation10 + $0x8] sm:$0xff]
        %v476 = vld [vmem:[#allocation10 + $0x10] sm:$0xff]
        %v477 = vld [vmem:[#allocation10 + $0x18] sm:$0xff]
        %v478 = vld [vmem:[#allocation10 + $0x20] sm:$0xff]
        %v479 = vld [vmem:[#allocation10 + $0x28] sm:$0xff]
        %v480 = vld [vmem:[#allocation10 + $0x30] sm:$0xff]
        %v481 = vld [vmem:[#allocation10 + $0x38] sm:$0xff]
        %v482 = vld [vmem:[#allocation10 + $0x40] sm:$0xff]
        %v483 = vld [vmem:[#allocation10 + $0x48] sm:$0xff]
        %v484 = vld [vmem:[#allocation10 + $0x50] sm:$0xff]
        %v485 = vld [vmem:[#allocation10 + $0x58] sm:$0xff]
        %v486 = vld [vmem:[#allocation10 + $0x60] sm:$0xff]
        %v487 = vld [vmem:[#allocation10 + $0x68] sm:$0xff]
        %v488 = vld [vmem:[#allocation10 + $0x70] sm:$0xff]
        %v489 = vld [vmem:[#allocation10 + $0x78] sm:$0xff]
        %s490 = scalar_lea.vmem [#allocation10], 128
        %v491 = vld [vmem:[%s490] sm:$0xff]
        %v492 = vld [vmem:[%s490 + $0x8] sm:$0xff]
        %v493 = vld [vmem:[%s490 + $0x10] sm:$0xff]
        %v494 = vld [vmem:[%s490 + $0x18] sm:$0xff]
        %v495 = vld [vmem:[%s490 + $0x20] sm:$0xff]
        %v496 = vld [vmem:[%s490 + $0x28] sm:$0xff]
        %v497 = vld [vmem:[%s490 + $0x30] sm:$0xff]
        %v498 = vld [vmem:[%s490 + $0x38] sm:$0xff]
        %v499 = vld [vmem:[%s490 + $0x40] sm:$0xff]
        %v500 = vld [vmem:[%s490 + $0x48] sm:$0xff]
        %v501 = vld [vmem:[%s490 + $0x50] sm:$0xff]
        %v502 = vld [vmem:[%s490 + $0x58] sm:$0xff]
        %v503 = vld [vmem:[%s490 + $0x60] sm:$0xff]
        %v504 = vld [vmem:[%s490 + $0x68] sm:$0xff]
        %v505 = vld [vmem:[%s490 + $0x70] sm:$0xff]
        %v506 = vld [vmem:[%s490 + $0x78] sm:$0xff]
        %s507 = scalar_lea.vmem [#allocation10], 256
        %v508 = vld [vmem:[%s507] sm:$0xff]
        %v509 = vld [vmem:[%s507 + $0x8] sm:$0xff]
        %v510 = vld [vmem:[%s507 + $0x10] sm:$0xff]
        %v511 = vld [vmem:[%s507 + $0x18] sm:$0xff]
        %v512 = vld [vmem:[%s507 + $0x20] sm:$0xff]
        %v513 = vld [vmem:[%s507 + $0x28] sm:$0xff]
        %v514 = vld [vmem:[%s507 + $0x30] sm:$0xff]
        %v515 = vld [vmem:[%s507 + $0x38] sm:$0xff]
        %v516 = vld [vmem:[%s507 + $0x40] sm:$0xff]
        %v517 = vld [vmem:[%s507 + $0x48] sm:$0xff]
        %v518 = vld [vmem:[%s507 + $0x50] sm:$0xff]
        %v519 = vld [vmem:[%s507 + $0x58] sm:$0xff]
        %v520 = vld [vmem:[%s507 + $0x60] sm:$0xff]
        %v521 = vld [vmem:[%s507 + $0x68] sm:$0xff]
        %v522 = vld [vmem:[%s507 + $0x70] sm:$0xff]
        %v523 = vld [vmem:[%s507 + $0x78] sm:$0xff]
        %v524 = vld [vmem:[%s7] sm:$0x1]
        %s525 = scalar_lea.vmem %s7, 1
        %v526 = vld [vmem:[%s525] sm:$0x1]
        %s527 = scalar_lea.vmem %s7, 2
        %v528 = vld [vmem:[%s527] sm:$0x1]
        %v530 = vlaneseq
        %v531 = vshrl.u32 %v530, 7
        %v532 = vsub.s32 0, %v531
        %v533 = vrot.slane %v469, %v532
        %vm535 = vcmask 523264
        %v537 = vsel %vm535, %v441, 0
        %539 = vmatprep.subr.mxu0 0.0
        %540 = vmatpush1.msra.mxu0 %v443
        %541 = vmatprep.subr.mxu0 0.0
        %542 = vmatpush1.msra.mxu0 %v444
        %543 = vmatprep.subr.mxu0 0.0
        %544 = vmatpush1.msra.mxu0 %v445
        %545 = vmatprep.subr.mxu0 0.0
        %546 = vmatpush1.msra.mxu0 %v446
        %547 = vmatprep.subr.mxu0 0.0
        %548 = vmatpush1.msra.mxu0 %v447
        %549 = vmatprep.subr.mxu0 0.0
        %550 = vmatpush1.msra.mxu0 %v448
        %551 = vmatprep.subr.mxu0 0.0
        %552 = vmatpush1.msra.mxu0 %v449
        %553 = vmatprep.subr.mxu0 0.0
        %554 = vmatpush1.msra.mxu0 %v450
        %555 = vmatprep.subr.mxu0 0.0
        %556 = vmatpush1.msra.mxu0 0.0
        %557 = vmatprep.subr.mxu0 0.0
        %558 = vmatpush1.msra.mxu0 0.0
        %559 = vmatprep.subr.mxu0 0.0
        %560 = vmatpush1.msra.mxu0 0.0
        %561 = vmatprep.subr.mxu0 0.0
        %562 = vmatpush1.msra.mxu0 0.0
        %563 = vmatprep.subr.mxu0 0.0
        %564 = vmatpush1.msra.mxu0 0.0
        %565 = vmatprep.subr.mxu0 0.0
        %566 = vmatpush1.msra.mxu0 0.0
        %567 = vmatprep.subr.mxu0 0.0
        %568 = vmatpush1.msra.mxu0 0.0
        %569 = vmatprep.subr.mxu0 0.0
        %570 = vmatpush1.msra.mxu0 0.0
        %571 = vmatprep.subr.mxu0 0.0
        %572 = vmatpush1.msra.mxu0 0.0
        %573 = vmatprep.subr.mxu0 0.0
        %574 = vmatpush1.msra.mxu0 0.0
        %575 = vmatprep.subr.mxu0 0.0
        %576 = vmatpush1.msra.mxu0 0.0
        %577 = vmatprep.subr.mxu0 0.0
        %578 = vmatpush1.msra.mxu0 0.0
        %579 = vmatprep.subr.mxu0 0.0
        %580 = vmatpush1.msra.mxu0 0.0
        %581 = vmatprep.subr.mxu0 0.0
        %582 = vmatpush1.msra.mxu0 0.0
        %583 = vmatprep.subr.mxu0 0.0
        %584 = vmatpush1.msra.mxu0 0.0
        %585 = vmatprep.subr.mxu0 0.0
        %586 = vmatpush1.msra.mxu0 0.0
        %587 = vmatprep.subr.mxu0 0.0
        %588 = vmatpush1.msra.mxu0 0.0
        %589 = vmatprep.subr.mxu0 0.0
        %590 = vmatpush1.msra.mxu0 0.0
        %591 = vmatprep.subr.mxu0 0.0
        %592 = vmatpush1.msra.mxu0 0.0
        %593 = vmatprep.subr.mxu0 0.0
        %594 = vmatpush1.msra.mxu0 0.0
        %595 = vmatprep.subr.mxu0 0.0
        %596 = vmatpush1.msra.mxu0 0.0
        %597 = vmatprep.subr.mxu0 0.0
        %598 = vmatpush1.msra.mxu0 0.0
        %599 = vmatprep.subr.mxu0 0.0
        %600 = vmatpush1.msra.mxu0 0.0
        %601 = vmatprep.subr.mxu0 0.0
        %602 = vmatpush1.msra.mxu0 0.0
        %603 = vmatprep.mubr.f32.mxu0 0.0
        %604 = vmatmul.mubr.f32.gmra.mrb[0].mxu0 %v537
        %v605 = vpop.f32.mrb[0].mxu0
        %v606 = vadd.f32 %v533, %v605
        %v607 = vpop.f32.mrb[0].mxu0
        %608 = vdwg.mxu0
        %v610 = vlaneseq
        %v611 = vshrl.u32 %v610, 7
        %v612 = vsub.s32 0, %v611
        %v613 = vrot.slane %v471, %v612
        %615 = vmatprep.subr.mxu0 0.0
        %616 = vmatpush1.msra.mxu0 %v452
        %617 = vmatprep.subr.mxu0 0.0
        %618 = vmatpush1.msra.mxu0 %v453
        %619 = vmatprep.subr.mxu0 0.0
        %620 = vmatpush1.msra.mxu0 %v454
        %621 = vmatprep.subr.mxu0 0.0
        %622 = vmatpush1.msra.mxu0 %v455
        %623 = vmatprep.subr.mxu0 0.0
        %624 = vmatpush1.msra.mxu0 %v456
        %625 = vmatprep.subr.mxu0 0.0
        %626 = vmatpush1.msra.mxu0 %v457
        %627 = vmatprep.subr.mxu0 0.0
        %628 = vmatpush1.msra.mxu0 %v458
        %629 = vmatprep.subr.mxu0 0.0
        %630 = vmatpush1.msra.mxu0 %v459
        %631 = vmatprep.subr.mxu0 0.0
        %632 = vmatpush1.msra.mxu0 0.0
        %633 = vmatprep.subr.mxu0 0.0
        %634 = vmatpush1.msra.mxu0 0.0
        %635 = vmatprep.subr.mxu0 0.0
        %636 = vmatpush1.msra.mxu0 0.0
        %637 = vmatprep.subr.mxu0 0.0
        %638 = vmatpush1.msra.mxu0 0.0
        %639 = vmatprep.subr.mxu0 0.0
        %640 = vmatpush1.msra.mxu0 0.0
        %641 = vmatprep.subr.mxu0 0.0
        %642 = vmatpush1.msra.mxu0 0.0
        %643 = vmatprep.subr.mxu0 0.0
        %644 = vmatpush1.msra.mxu0 0.0
        %645 = vmatprep.subr.mxu0 0.0
        %646 = vmatpush1.msra.mxu0 0.0
        %647 = vmatprep.subr.mxu0 0.0
        %648 = vmatpush1.msra.mxu0 0.0
        %649 = vmatprep.subr.mxu0 0.0
        %650 = vmatpush1.msra.mxu0 0.0
        %651 = vmatprep.subr.mxu0 0.0
        %652 = vmatpush1.msra.mxu0 0.0
        %653 = vmatprep.subr.mxu0 0.0
        %654 = vmatpush1.msra.mxu0 0.0
        %655 = vmatprep.subr.mxu0 0.0
        %656 = vmatpush1.msra.mxu0 0.0
        %657 = vmatprep.subr.mxu0 0.0
        %658 = vmatpush1.msra.mxu0 0.0
        %659 = vmatprep.subr.mxu0 0.0
        %660 = vmatpush1.msra.mxu0 0.0
        %661 = vmatprep.subr.mxu0 0.0
        %662 = vmatpush1.msra.mxu0 0.0
        %663 = vmatprep.subr.mxu0 0.0
        %664 = vmatpush1.msra.mxu0 0.0
        %665 = vmatprep.subr.mxu0 0.0
        %666 = vmatpush1.msra.mxu0 0.0
        %667 = vmatprep.subr.mxu0 0.0
        %668 = vmatpush1.msra.mxu0 0.0
        %669 = vmatprep.subr.mxu0 0.0
        %670 = vmatpush1.msra.mxu0 0.0
        %671 = vmatprep.subr.mxu0 0.0
        %672 = vmatpush1.msra.mxu0 0.0
        %673 = vmatprep.subr.mxu0 0.0
        %674 = vmatpush1.msra.mxu0 0.0
        %675 = vmatprep.subr.mxu0 0.0
        %676 = vmatpush1.msra.mxu0 0.0
        %677 = vmatprep.subr.mxu0 0.0
        %678 = vmatpush1.msra.mxu0 0.0
        %679 = vmatprep.mubr.f32.mxu0 0.0
        %680 = vmatmul.mubr.f32.gmra.mrb[0].mxu0 %v537
        %v681 = vpop.f32.mrb[0].mxu0
        %v682 = vadd.f32 %v613, %v681
        %v683 = vpop.f32.mrb[0].mxu0
        %684 = vdwg.mxu0
        %v686 = vlaneseq
        %v687 = vshrl.u32 %v686, 7
        %v688 = vsub.s32 0, %v687
        %v689 = vrot.slane %v473, %v688
        %691 = vmatprep.subr.mxu0 0.0
        %692 = vmatpush1.msra.mxu0 %v461
        %693 = vmatprep.subr.mxu0 0.0
        %694 = vmatpush1.msra.mxu0 %v462
        %695 = vmatprep.subr.mxu0 0.0
        %696 = vmatpush1.msra.mxu0 %v463
        %697 = vmatprep.subr.mxu0 0.0
        %698 = vmatpush1.msra.mxu0 %v464
        %699 = vmatprep.subr.mxu0 0.0
        %700 = vmatpush1.msra.mxu0 %v465
        %701 = vmatprep.subr.mxu0 0.0
        %702 = vmatpush1.msra.mxu0 %v466
        %703 = vmatprep.subr.mxu0 0.0
        %704 = vmatpush1.msra.mxu0 %v467
        %705 = vmatprep.subr.mxu0 0.0
        %706 = vmatpush1.msra.mxu0 %v468
        %707 = vmatprep.subr.mxu0 0.0
        %708 = vmatpush1.msra.mxu0 0.0
        %709 = vmatprep.subr.mxu0 0.0
        %710 = vmatpush1.msra.mxu0 0.0
        %711 = vmatprep.subr.mxu0 0.0
        %712 = vmatpush1.msra.mxu0 0.0
        %713 = vmatprep.subr.mxu0 0.0
        %714 = vmatpush1.msra.mxu0 0.0
        %715 = vmatprep.subr.mxu0 0.0
        %716 = vmatpush1.msra.mxu0 0.0
        %717 = vmatprep.subr.mxu0 0.0
        %718 = vmatpush1.msra.mxu0 0.0
        %719 = vmatprep.subr.mxu0 0.0
        %720 = vmatpush1.msra.mxu0 0.0
        %721 = vmatprep.subr.mxu0 0.0
        %722 = vmatpush1.msra.mxu0 0.0
        %723 = vmatprep.subr.mxu0 0.0
        %724 = vmatpush1.msra.mxu0 0.0
        %725 = vmatprep.subr.mxu0 0.0
        %726 = vmatpush1.msra.mxu0 0.0
        %727 = vmatprep.subr.mxu0 0.0
        %728 = vmatpush1.msra.mxu0 0.0
        %729 = vmatprep.subr.mxu0 0.0
        %730 = vmatpush1.msra.mxu0 0.0
        %731 = vmatprep.subr.mxu0 0.0
        %732 = vmatpush1.msra.mxu0 0.0
        %733 = vmatprep.subr.mxu0 0.0
        %734 = vmatpush1.msra.mxu0 0.0
        %735 = vmatprep.subr.mxu0 0.0
        %736 = vmatpush1.msra.mxu0 0.0
        %737 = vmatprep.subr.mxu0 0.0
        %738 = vmatpush1.msra.mxu0 0.0
        %739 = vmatprep.subr.mxu0 0.0
        %740 = vmatpush1.msra.mxu0 0.0
        %741 = vmatprep.subr.mxu0 0.0
        %742 = vmatpush1.msra.mxu0 0.0
        %743 = vmatprep.subr.mxu0 0.0
        %744 = vmatpush1.msra.mxu0 0.0
        %745 = vmatprep.subr.mxu0 0.0
        %746 = vmatpush1.msra.mxu0 0.0
        %747 = vmatprep.subr.mxu0 0.0
        %748 = vmatpush1.msra.mxu0 0.0
        %749 = vmatprep.subr.mxu0 0.0
        %750 = vmatpush1.msra.mxu0 0.0
        %751 = vmatprep.subr.mxu0 0.0
        %752 = vmatpush1.msra.mxu0 0.0
        %753 = vmatprep.subr.mxu0 0.0
        %754 = vmatpush1.msra.mxu0 0.0
        %755 = vmatprep.mubr.f32.mxu0 0.0
        %756 = vmatmul.mubr.f32.gmra.mrb[0].mxu0 %v537
        %v757 = vpop.f32.mrb[0].mxu0
        %v758 = vadd.f32 %v689, %v757
        %v759 = vpop.f32.mrb[0].mxu0
        %760 = vdwg.mxu0
        %v762 = vlaneseq
        %v763 = vshrl.u32 %v762, 7
        %v764 = vsub.s32 0, %v763
        %v765 = vrot.slane %v524, %v764
        %767 = vmatprep.subr.mxu0 0.0
        %768 = vmatpush1.msra.mxu0 %v474
        %769 = vmatprep.subr.mxu0 0.0
        %770 = vmatpush1.msra.mxu0 %v475
        %771 = vmatprep.subr.mxu0 0.0
        %772 = vmatpush1.msra.mxu0 %v476
        %773 = vmatprep.subr.mxu0 0.0
        %774 = vmatpush1.msra.mxu0 %v477
        %775 = vmatprep.subr.mxu0 0.0
        %776 = vmatpush1.msra.mxu0 %v478
        %777 = vmatprep.subr.mxu0 0.0
        %778 = vmatpush1.msra.mxu0 %v479
        %779 = vmatprep.subr.mxu0 0.0
        %780 = vmatpush1.msra.mxu0 %v480
        %781 = vmatprep.subr.mxu0 0.0
        %782 = vmatpush1.msra.mxu0 %v481
        %783 = vmatprep.subr.mxu0 0.0
        %784 = vmatpush1.msra.mxu0 %v482
        %785 = vmatprep.subr.mxu0 0.0
        %786 = vmatpush1.msra.mxu0 %v483
        %787 = vmatprep.subr.mxu0 0.0
        %788 = vmatpush1.msra.mxu0 %v484
        %789 = vmatprep.subr.mxu0 0.0
        %790 = vmatpush1.msra.mxu0 %v485
        %791 = vmatprep.subr.mxu0 0.0
        %792 = vmatpush1.msra.mxu0 %v486
        %793 = vmatprep.subr.mxu0 0.0
        %794 = vmatpush1.msra.mxu0 %v487
        %795 = vmatprep.subr.mxu0 0.0
        %796 = vmatpush1.msra.mxu0 %v488
        %797 = vmatprep.subr.mxu0 0.0
        %798 = vmatpush1.msra.mxu0 %v489
        %799 = vmatprep.subr.mxu0 0.0
        %800 = vmatpush1.msra.mxu0 0.0
        %801 = vmatprep.subr.mxu0 0.0
        %802 = vmatpush1.msra.mxu0 0.0
        %803 = vmatprep.subr.mxu0 0.0
        %804 = vmatpush1.msra.mxu0 0.0
        %805 = vmatprep.subr.mxu0 0.0
        %806 = vmatpush1.msra.mxu0 0.0
        %807 = vmatprep.subr.mxu0 0.0
        %808 = vmatpush1.msra.mxu0 0.0
        %809 = vmatprep.subr.mxu0 0.0
        %810 = vmatpush1.msra.mxu0 0.0
        %811 = vmatprep.subr.mxu0 0.0
        %812 = vmatpush1.msra.mxu0 0.0
        %813 = vmatprep.subr.mxu0 0.0
        %814 = vmatpush1.msra.mxu0 0.0
        %815 = vmatprep.subr.mxu0 0.0
        %816 = vmatpush1.msra.mxu0 0.0
        %817 = vmatprep.subr.mxu0 0.0
        %818 = vmatpush1.msra.mxu0 0.0
        %819 = vmatprep.subr.mxu0 0.0
        %820 = vmatpush1.msra.mxu0 0.0
        %821 = vmatprep.subr.mxu0 0.0
        %822 = vmatpush1.msra.mxu0 0.0
        %823 = vmatprep.subr.mxu0 0.0
        %824 = vmatpush1.msra.mxu0 0.0
        %825 = vmatprep.subr.mxu0 0.0
        %826 = vmatpush1.msra.mxu0 0.0
        %827 = vmatprep.subr.mxu0 0.0
        %828 = vmatpush1.msra.mxu0 0.0
        %829 = vmatprep.subr.mxu0 0.0
        %830 = vmatpush1.msra.mxu0 0.0
        %831 = vmatprep.mubr.f32.mxu0 0.0
        %832 = vmatmul.mubr.f32.gmra.mrb[0].mxu0 %v442
        %v833 = vpop.f32.mrb[0].mxu0
        %v834 = vadd.f32 %v765, %v833
        %v835 = vpop.f32.mrb[0].mxu0
        %836 = vdwg.mxu0
        %v838 = vlaneseq
        %v839 = vshrl.u32 %v838, 7
        %v840 = vsub.s32 0, %v839
        %v841 = vrot.slane %v526, %v840
        %843 = vmatprep.subr.mxu0 0.0
        %844 = vmatpush1.msra.mxu0 %v491
        %845 = vmatprep.subr.mxu0 0.0
        %846 = vmatpush1.msra.mxu0 %v492
        %847 = vmatprep.subr.mxu0 0.0
        %848 = vmatpush1.msra.mxu0 %v493
        %849 = vmatprep.subr.mxu0 0.0
        %850 = vmatpush1.msra.mxu0 %v494
        %851 = vmatprep.subr.mxu0 0.0
        %852 = vmatpush1.msra.mxu0 %v495
        %853 = vmatprep.subr.mxu0 0.0
        %854 = vmatpush1.msra.mxu0 %v496
        %855 = vmatprep.subr.mxu0 0.0
        %856 = vmatpush1.msra.mxu0 %v497
        %857 = vmatprep.subr.mxu0 0.0
        %858 = vmatpush1.msra.mxu0 %v498
        %859 = vmatprep.subr.mxu0 0.0
        %860 = vmatpush1.msra.mxu0 %v499
        %861 = vmatprep.subr.mxu0 0.0
        %862 = vmatpush1.msra.mxu0 %v500
        %863 = vmatprep.subr.mxu0 0.0
        %864 = vmatpush1.msra.mxu0 %v501
        %865 = vmatprep.subr.mxu0 0.0
        %866 = vmatpush1.msra.mxu0 %v502
        %867 = vmatprep.subr.mxu0 0.0
        %868 = vmatpush1.msra.mxu0 %v503
        %869 = vmatprep.subr.mxu0 0.0
        %870 = vmatpush1.msra.mxu0 %v504
        %871 = vmatprep.subr.mxu0 0.0
        %872 = vmatpush1.msra.mxu0 %v505
        %873 = vmatprep.subr.mxu0 0.0
        %874 = vmatpush1.msra.mxu0 %v506
        %875 = vmatprep.subr.mxu0 0.0
        %876 = vmatpush1.msra.mxu0 0.0
        %877 = vmatprep.subr.mxu0 0.0
        %878 = vmatpush1.msra.mxu0 0.0
        %879 = vmatprep.subr.mxu0 0.0
        %880 = vmatpush1.msra.mxu0 0.0
        %881 = vmatprep.subr.mxu0 0.0
        %882 = vmatpush1.msra.mxu0 0.0
        %883 = vmatprep.subr.mxu0 0.0
        %884 = vmatpush1.msra.mxu0 0.0
        %885 = vmatprep.subr.mxu0 0.0
        %886 = vmatpush1.msra.mxu0 0.0
        %887 = vmatprep.subr.mxu0 0.0
        %888 = vmatpush1.msra.mxu0 0.0
        %889 = vmatprep.subr.mxu0 0.0
        %890 = vmatpush1.msra.mxu0 0.0
        %891 = vmatprep.subr.mxu0 0.0
        %892 = vmatpush1.msra.mxu0 0.0
        %893 = vmatprep.subr.mxu0 0.0
        %894 = vmatpush1.msra.mxu0 0.0
        %895 = vmatprep.subr.mxu0 0.0
        %896 = vmatpush1.msra.mxu0 0.0
        %897 = vmatprep.subr.mxu0 0.0
        %898 = vmatpush1.msra.mxu0 0.0
        %899 = vmatprep.subr.mxu0 0.0
        %900 = vmatpush1.msra.mxu0 0.0
        %901 = vmatprep.subr.mxu0 0.0
        %902 = vmatpush1.msra.mxu0 0.0
        %903 = vmatprep.subr.mxu0 0.0
        %904 = vmatpush1.msra.mxu0 0.0
        %905 = vmatprep.subr.mxu0 0.0
        %906 = vmatpush1.msra.mxu0 0.0
        %907 = vmatprep.mubr.f32.mxu0 0.0
        %908 = vmatmul.mubr.f32.gmra.mrb[0].mxu0 %v442
        %v909 = vpop.f32.mrb[0].mxu0
        %v910 = vadd.f32 %v841, %v909
        %v911 = vpop.f32.mrb[0].mxu0
        %912 = vdwg.mxu0
        %v914 = vlaneseq
        %v915 = vshrl.u32 %v914, 7
        %v916 = vsub.s32 0, %v915
        %v917 = vrot.slane %v528, %v916
        %919 = vmatprep.subr.mxu0 0.0
        %920 = vmatpush1.msra.mxu0 %v508
        %921 = vmatprep.subr.mxu0 0.0
        %922 = vmatpush1.msra.mxu0 %v509
        %923 = vmatprep.subr.mxu0 0.0
        %924 = vmatpush1.msra.mxu0 %v510
        %925 = vmatprep.subr.mxu0 0.0
        %926 = vmatpush1.msra.mxu0 %v511
        %927 = vmatprep.subr.mxu0 0.0
        %928 = vmatpush1.msra.mxu0 %v512
        %929 = vmatprep.subr.mxu0 0.0
        %930 = vmatpush1.msra.mxu0 %v513
        %931 = vmatprep.subr.mxu0 0.0
        %932 = vmatpush1.msra.mxu0 %v514
        %933 = vmatprep.subr.mxu0 0.0
        %934 = vmatpush1.msra.mxu0 %v515
        %935 = vmatprep.subr.mxu0 0.0
        %936 = vmatpush1.msra.mxu0 %v516
        %937 = vmatprep.subr.mxu0 0.0
        %938 = vmatpush1.msra.mxu0 %v517
        %939 = vmatprep.subr.mxu0 0.0
        %940 = vmatpush1.msra.mxu0 %v518
        %941 = vmatprep.subr.mxu0 0.0
        %942 = vmatpush1.msra.mxu0 %v519
        %943 = vmatprep.subr.mxu0 0.0
        %944 = vmatpush1.msra.mxu0 %v520
        %945 = vmatprep.subr.mxu0 0.0
        %946 = vmatpush1.msra.mxu0 %v521
        %947 = vmatprep.subr.mxu0 0.0
        %948 = vmatpush1.msra.mxu0 %v522
        %949 = vmatprep.subr.mxu0 0.0
        %950 = vmatpush1.msra.mxu0 %v523
        %951 = vmatprep.subr.mxu0 0.0
        %952 = vmatpush1.msra.mxu0 0.0
        %953 = vmatprep.subr.mxu0 0.0
        %954 = vmatpush1.msra.mxu0 0.0
        %955 = vmatprep.subr.mxu0 0.0
        %956 = vmatpush1.msra.mxu0 0.0
        %957 = vmatprep.subr.mxu0 0.0
        %958 = vmatpush1.msra.mxu0 0.0
        %959 = vmatprep.subr.mxu0 0.0
        %960 = vmatpush1.msra.mxu0 0.0
        %961 = vmatprep.subr.mxu0 0.0
        %962 = vmatpush1.msra.mxu0 0.0
        %963 = vmatprep.subr.mxu0 0.0
        %964 = vmatpush1.msra.mxu0 0.0
        %965 = vmatprep.subr.mxu0 0.0
        %966 = vmatpush1.msra.mxu0 0.0
        %967 = vmatprep.subr.mxu0 0.0
        %968 = vmatpush1.msra.mxu0 0.0
        %969 = vmatprep.subr.mxu0 0.0
        %970 = vmatpush1.msra.mxu0 0.0
        %971 = vmatprep.subr.mxu0 0.0
        %972 = vmatpush1.msra.mxu0 0.0
        %973 = vmatprep.subr.mxu0 0.0
        %974 = vmatpush1.msra.mxu0 0.0
        %975 = vmatprep.subr.mxu0 0.0
        %976 = vmatpush1.msra.mxu0 0.0
        %977 = vmatprep.subr.mxu0 0.0
        %978 = vmatpush1.msra.mxu0 0.0
        %979 = vmatprep.subr.mxu0 0.0
        %980 = vmatpush1.msra.mxu0 0.0
        %981 = vmatprep.subr.mxu0 0.0
        %982 = vmatpush1.msra.mxu0 0.0
        %983 = vmatprep.mubr.f32.mxu0 0.0
        %984 = vmatmul.mubr.f32.gmra.mrb[0].mxu0 %v442
        %v985 = vpop.f32.mrb[0].mxu0
        %v986 = vadd.f32 %v917, %v985
        %v987 = vpop.f32.mrb[0].mxu0
        %988 = vdwg.mxu0
        %v989 = vadd.f32 %v606, %v834
        %v990 = vxor.u32 %v989, 2147483648
        %v991 = vmul.f32 %v990, 1.442695
        %v992 = vpow.pop %v991
        %v993 = vadd.f32 %v992, 1.0
        %v994 = vrcp.pop %v993
        %v995 = vmul.f32 1.0, %v994
        %v996 = vadd.f32 %v682, %v910
        %v997 = vxor.u32 %v996, 2147483648
        %v998 = vmul.f32 %v997, 1.442695
        %v999 = vpow.pop %v998
        %v1000 = vadd.f32 %v999, 1.0
        %v1001 = vrcp.pop %v1000
        %v1002 = vmul.f32 1.0, %v1001
        %v1003 = vmul.f32 %v995, %v986
        %v1004 = vadd.f32 %v758, %v1003
        %v1005 = vtanh.pop %v1004
        %v1006 = vsub.f32 1.0, %v1002
        %v1007 = vmul.f32 %v1006, %v1005
        %v1008 = vmul.f32 %v1002, %v442
        %v1009 = vadd.f32 %v1007, %v1008
        %1010 = vst [vmem:[%s440] sm:$0xff] %v1009
        %s1011 = scalar_lea.vmem %s384, 8 [#allocation5]
        %v1012 = vld [vmem:[%s1011] sm:$0xff]
        %v1013 = vld [vmem:[#allocation8] sm:$0xff]
        %v1014 = vld [vmem:[#allocation8 + $0x8] sm:$0xff]
        %v1015 = vld [vmem:[#allocation8 + $0x10] sm:$0xff]
        %v1016 = vld [vmem:[#allocation8 + $0x18] sm:$0xff]
        %v1017 = vld [vmem:[#allocation8 + $0x20] sm:$0xff]
        %v1018 = vld [vmem:[#allocation8 + $0x28] sm:$0xff]
        %v1019 = vld [vmem:[#allocation8 + $0x30] sm:$0xff]
        %v1020 = vld [vmem:[#allocation8 + $0x38] sm:$0xff]
        %v1021 = vld [vmem:[#allocation8 + $0x40] sm:$0xff]
        %v1022 = vld [vmem:[#allocation8 + $0x48] sm:$0xff]
        %v1023 = vld [vmem:[#allocation8 + $0x50] sm:$0xff]
        %v1024 = vld [vmem:[#allocation8 + $0x58] sm:$0xff]
        %v1025 = vld [vmem:[#allocation8 + $0x60] sm:$0xff]
        %v1026 = vld [vmem:[#allocation8 + $0x68] sm:$0xff]
        %v1027 = vld [vmem:[#allocation8 + $0x70] sm:$0xff]
        %v1028 = vld [vmem:[#allocation8 + $0x78] sm:$0xff]
        %s1029 = scalar_lea.vmem [#allocation8], 128
        %v1030 = vld [vmem:[%s1029] sm:$0xff]
        %v1031 = vld [vmem:[%s1029 + $0x8] sm:$0xff]
        %v1032 = vld [vmem:[%s1029 + $0x10] sm:$0xff]
        %v1033 = vld [vmem:[%s1029 + $0x18] sm:$0xff]
        %v1034 = vld [vmem:[%s1029 + $0x20] sm:$0xff]
        %v1035 = vld [vmem:[%s1029 + $0x28] sm:$0xff]
        %v1036 = vld [vmem:[%s1029 + $0x30] sm:$0xff]
        %v1037 = vld [vmem:[%s1029 + $0x38] sm:$0xff]
        %v1038 = vld [vmem:[%s1029 + $0x40] sm:$0xff]
        %v1039 = vld [vmem:[%s1029 + $0x48] sm:$0xff]
        %v1040 = vld [vmem:[%s1029 + $0x50] sm:$0xff]
        %v1041 = vld [vmem:[%s1029 + $0x58] sm:$0xff]
        %v1042 = vld [vmem:[%s1029 + $0x60] sm:$0xff]
        %v1043 = vld [vmem:[%s1029 + $0x68] sm:$0xff]
        %v1044 = vld [vmem:[%s1029 + $0x70] sm:$0xff]
        %v1045 = vld [vmem:[%s1029 + $0x78] sm:$0xff]
        %s1046 = scalar_lea.vmem [#allocation8], 256
        %v1047 = vld [vmem:[%s1046] sm:$0xff]
        %v1048 = vld [vmem:[%s1046 + $0x8] sm:$0xff]
        %v1049 = vld [vmem:[%s1046 + $0x10] sm:$0xff]
        %v1050 = vld [vmem:[%s1046 + $0x18] sm:$0xff]
        %v1051 = vld [vmem:[%s1046 + $0x20] sm:$0xff]
        %v1052 = vld [vmem:[%s1046 + $0x28] sm:$0xff]
        %v1053 = vld [vmem:[%s1046 + $0x30] sm:$0xff]
        %v1054 = vld [vmem:[%s1046 + $0x38] sm:$0xff]
        %v1055 = vld [vmem:[%s1046 + $0x40] sm:$0xff]
        %v1056 = vld [vmem:[%s1046 + $0x48] sm:$0xff]
        %v1057 = vld [vmem:[%s1046 + $0x50] sm:$0xff]
        %v1058 = vld [vmem:[%s1046 + $0x58] sm:$0xff]
        %v1059 = vld [vmem:[%s1046 + $0x60] sm:$0xff]
        %v1060 = vld [vmem:[%s1046 + $0x68] sm:$0xff]
        %v1061 = vld [vmem:[%s1046 + $0x70] sm:$0xff]
        %v1062 = vld [vmem:[%s1046 + $0x78] sm:$0xff]
        %v1063 = vld [vmem:[%s5] sm:$0x1]
        %s1064 = scalar_lea.vmem %s5, 1
        %v1065 = vld [vmem:[%s1064] sm:$0x1]
        %s1066 = scalar_lea.vmem %s5, 2
        %v1067 = vld [vmem:[%s1066] sm:$0x1]
        %s1068 = scalar_lea.vmem [#allocation10], 384
        %v1069 = vld [vmem:[%s1068] sm:$0xff]
        %v1070 = vld [vmem:[%s1068 + $0x8] sm:$0xff]
        %v1071 = vld [vmem:[%s1068 + $0x10] sm:$0xff]
        %v1072 = vld [vmem:[%s1068 + $0x18] sm:$0xff]
        %v1073 = vld [vmem:[%s1068 + $0x20] sm:$0xff]
        %v1074 = vld [vmem:[%s1068 + $0x28] sm:$0xff]
        %v1075 = vld [vmem:[%s1068 + $0x30] sm:$0xff]
        %v1076 = vld [vmem:[%s1068 + $0x38] sm:$0xff]
        %v1077 = vld [vmem:[%s1068 + $0x40] sm:$0xff]
        %v1078 = vld [vmem:[%s1068 + $0x48] sm:$0xff]
        %v1079 = vld [vmem:[%s1068 + $0x50] sm:$0xff]
        %v1080 = vld [vmem:[%s1068 + $0x58] sm:$0xff]
        %v1081 = vld [vmem:[%s1068 + $0x60] sm:$0xff]
        %v1082 = vld [vmem:[%s1068 + $0x68] sm:$0xff]
        %v1083 = vld [vmem:[%s1068 + $0x70] sm:$0xff]
        %v1084 = vld [vmem:[%s1068 + $0x78] sm:$0xff]
        %s1085 = scalar_lea.vmem [#allocation10], 512
        %v1086 = vld [vmem:[%s1085] sm:$0xff]
        %v1087 = vld [vmem:[%s1085 + $0x8] sm:$0xff]
        %v1088 = vld [vmem:[%s1085 + $0x10] sm:$0xff]
        %v1089 = vld [vmem:[%s1085 + $0x18] sm:$0xff]
        %v1090 = vld [vmem:[%s1085 + $0x20] sm:$0xff]
        %v1091 = vld [vmem:[%s1085 + $0x28] sm:$0xff]
        %v1092 = vld [vmem:[%s1085 + $0x30] sm:$0xff]
        %v1093 = vld [vmem:[%s1085 + $0x38] sm:$0xff]
        %v1094 = vld [vmem:[%s1085 + $0x40] sm:$0xff]
        %v1095 = vld [vmem:[%s1085 + $0x48] sm:$0xff]
        %v1096 = vld [vmem:[%s1085 + $0x50] sm:$0xff]
        %v1097 = vld [vmem:[%s1085 + $0x58] sm:$0xff]
        %v1098 = vld [vmem:[%s1085 + $0x60] sm:$0xff]
        %v1099 = vld [vmem:[%s1085 + $0x68] sm:$0xff]
        %v1100 = vld [vmem:[%s1085 + $0x70] sm:$0xff]
        %v1101 = vld [vmem:[%s1085 + $0x78] sm:$0xff]
        %s1102 = scalar_lea.vmem [#allocation10], 640
        %v1103 = vld [vmem:[%s1102] sm:$0xff]
        %v1104 = vld [vmem:[%s1102 + $0x8] sm:$0xff]
        %v1105 = vld [vmem:[%s1102 + $0x10] sm:$0xff]
        %v1106 = vld [vmem:[%s1102 + $0x18] sm:$0xff]
        %v1107 = vld [vmem:[%s1102 + $0x20] sm:$0xff]
        %v1108 = vld [vmem:[%s1102 + $0x28] sm:$0xff]
        %v1109 = vld [vmem:[%s1102 + $0x30] sm:$0xff]
        %v1110 = vld [vmem:[%s1102 + $0x38] sm:$0xff]
        %v1111 = vld [vmem:[%s1102 + $0x40] sm:$0xff]
        %v1112 = vld [vmem:[%s1102 + $0x48] sm:$0xff]
        %v1113 = vld [vmem:[%s1102 + $0x50] sm:$0xff]
        %v1114 = vld [vmem:[%s1102 + $0x58] sm:$0xff]
        %v1115 = vld [vmem:[%s1102 + $0x60] sm:$0xff]
        %v1116 = vld [vmem:[%s1102 + $0x68] sm:$0xff]
        %v1117 = vld [vmem:[%s1102 + $0x70] sm:$0xff]
        %v1118 = vld [vmem:[%s1102 + $0x78] sm:$0xff]
        %s1119 = scalar_lea.vmem %s7, 3
        %v1120 = vld [vmem:[%s1119] sm:$0x1]
        %s1121 = scalar_lea.vmem %s7, 4
        %v1122 = vld [vmem:[%s1121] sm:$0x1]
        %s1123 = scalar_lea.vmem %s7, 5
        %v1124 = vld [vmem:[%s1123] sm:$0x1]
        %v1126 = vlaneseq
        %v1127 = vshrl.u32 %v1126, 7
        %v1128 = vsub.s32 0, %v1127
        %v1129 = vrot.slane %v1063, %v1128
        %1131 = vmatprep.subr.mxu0 0.0
        %1132 = vmatpush1.msra.mxu0 %v1013
        %1133 = vmatprep.subr.mxu0 0.0
        %1134 = vmatpush1.msra.mxu0 %v1014
        %1135 = vmatprep.subr.mxu0 0.0
        %1136 = vmatpush1.msra.mxu0 %v1015
        %1137 = vmatprep.subr.mxu0 0.0
        %1138 = vmatpush1.msra.mxu0 %v1016
        %1139 = vmatprep.subr.mxu0 0.0
        %1140 = vmatpush1.msra.mxu0 %v1017
        %1141 = vmatprep.subr.mxu0 0.0
        %1142 = vmatpush1.msra.mxu0 %v1018
        %1143 = vmatprep.subr.mxu0 0.0
        %1144 = vmatpush1.msra.mxu0 %v1019
        %1145 = vmatprep.subr.mxu0 0.0
        %1146 = vmatpush1.msra.mxu0 %v1020
        %1147 = vmatprep.subr.mxu0 0.0
        %1148 = vmatpush1.msra.mxu0 %v1021
        %1149 = vmatprep.subr.mxu0 0.0
        %1150 = vmatpush1.msra.mxu0 %v1022
        %1151 = vmatprep.subr.mxu0 0.0
        %1152 = vmatpush1.msra.mxu0 %v1023
        %1153 = vmatprep.subr.mxu0 0.0
        %1154 = vmatpush1.msra.mxu0 %v1024
        %1155 = vmatprep.subr.mxu0 0.0
        %1156 = vmatpush1.msra.mxu0 %v1025
        %1157 = vmatprep.subr.mxu0 0.0
        %1158 = vmatpush1.msra.mxu0 %v1026
        %1159 = vmatprep.subr.mxu0 0.0
        %1160 = vmatpush1.msra.mxu0 %v1027
        %1161 = vmatprep.subr.mxu0 0.0
        %1162 = vmatpush1.msra.mxu0 %v1028
        %1163 = vmatprep.subr.mxu0 0.0
        %1164 = vmatpush1.msra.mxu0 0.0
        %1165 = vmatprep.subr.mxu0 0.0
        %1166 = vmatpush1.msra.mxu0 0.0
        %1167 = vmatprep.subr.mxu0 0.0
        %1168 = vmatpush1.msra.mxu0 0.0
        %1169 = vmatprep.subr.mxu0 0.0
        %1170 = vmatpush1.msra.mxu0 0.0
        %1171 = vmatprep.subr.mxu0 0.0
        %1172 = vmatpush1.msra.mxu0 0.0
        %1173 = vmatprep.subr.mxu0 0.0
        %1174 = vmatpush1.msra.mxu0 0.0
        %1175 = vmatprep.subr.mxu0 0.0
        %1176 = vmatpush1.msra.mxu0 0.0
        %1177 = vmatprep.subr.mxu0 0.0
        %1178 = vmatpush1.msra.mxu0 0.0
        %1179 = vmatprep.subr.mxu0 0.0
        %1180 = vmatpush1.msra.mxu0 0.0
        %1181 = vmatprep.subr.mxu0 0.0
        %1182 = vmatpush1.msra.mxu0 0.0
        %1183 = vmatprep.subr.mxu0 0.0
        %1184 = vmatpush1.msra.mxu0 0.0
        %1185 = vmatprep.subr.mxu0 0.0
        %1186 = vmatpush1.msra.mxu0 0.0
        %1187 = vmatprep.subr.mxu0 0.0
        %1188 = vmatpush1.msra.mxu0 0.0
        %1189 = vmatprep.subr.mxu0 0.0
        %1190 = vmatpush1.msra.mxu0 0.0
        %1191 = vmatprep.subr.mxu0 0.0
        %1192 = vmatpush1.msra.mxu0 0.0
        %1193 = vmatprep.subr.mxu0 0.0
        %1194 = vmatpush1.msra.mxu0 0.0
        %1195 = vmatprep.mubr.f32.mxu0 0.0
        %1196 = vmatmul.mubr.f32.gmra.mrb[0].mxu0 %v1009
        %v1197 = vpop.f32.mrb[0].mxu0
        %v1198 = vadd.f32 %v1129, %v1197
        %v1199 = vpop.f32.mrb[0].mxu0
        %1200 = vdwg.mxu0
        %v1202 = vlaneseq
        %v1203 = vshrl.u32 %v1202, 7
        %v1204 = vsub.s32 0, %v1203
        %v1205 = vrot.slane %v1065, %v1204
        %1207 = vmatprep.subr.mxu0 0.0
        %1208 = vmatpush1.msra.mxu0 %v1030
        %1209 = vmatprep.subr.mxu0 0.0
        %1210 = vmatpush1.msra.mxu0 %v1031
        %1211 = vmatprep.subr.mxu0 0.0
        %1212 = vmatpush1.msra.mxu0 %v1032
        %1213 = vmatprep.subr.mxu0 0.0
        %1214 = vmatpush1.msra.mxu0 %v1033
        %1215 = vmatprep.subr.mxu0 0.0
        %1216 = vmatpush1.msra.mxu0 %v1034
        %1217 = vmatprep.subr.mxu0 0.0
        %1218 = vmatpush1.msra.mxu0 %v1035
        %1219 = vmatprep.subr.mxu0 0.0
        %1220 = vmatpush1.msra.mxu0 %v1036
        %1221 = vmatprep.subr.mxu0 0.0
        %1222 = vmatpush1.msra.mxu0 %v1037
        %1223 = vmatprep.subr.mxu0 0.0
        %1224 = vmatpush1.msra.mxu0 %v1038
        %1225 = vmatprep.subr.mxu0 0.0
        %1226 = vmatpush1.msra.mxu0 %v1039
        %1227 = vmatprep.subr.mxu0 0.0
        %1228 = vmatpush1.msra.mxu0 %v1040
        %1229 = vmatprep.subr.mxu0 0.0
        %1230 = vmatpush1.msra.mxu0 %v1041
        %1231 = vmatprep.subr.mxu0 0.0
        %1232 = vmatpush1.msra.mxu0 %v1042
        %1233 = vmatprep.subr.mxu0 0.0
        %1234 = vmatpush1.msra.mxu0 %v1043
        %1235 = vmatprep.subr.mxu0 0.0
        %1236 = vmatpush1.msra.mxu0 %v1044
        %1237 = vmatprep.subr.mxu0 0.0
        %1238 = vmatpush1.msra.mxu0 %v1045
        %1239 = vmatprep.subr.mxu0 0.0
        %1240 = vmatpush1.msra.mxu0 0.0
        %1241 = vmatprep.subr.mxu0 0.0
        %1242 = vmatpush1.msra.mxu0 0.0
        %1243 = vmatprep.subr.mxu0 0.0
        %1244 = vmatpush1.msra.mxu0 0.0
        %1245 = vmatprep.subr.mxu0 0.0
        %1246 = vmatpush1.msra.mxu0 0.0
        %1247 = vmatprep.subr.mxu0 0.0
        %1248 = vmatpush1.msra.mxu0 0.0
        %1249 = vmatprep.subr.mxu0 0.0
        %1250 = vmatpush1.msra.mxu0 0.0
        %1251 = vmatprep.subr.mxu0 0.0
        %1252 = vmatpush1.msra.mxu0 0.0
        %1253 = vmatprep.subr.mxu0 0.0
        %1254 = vmatpush1.msra.mxu0 0.0
        %1255 = vmatprep.subr.mxu0 0.0
        %1256 = vmatpush1.msra.mxu0 0.0
        %1257 = vmatprep.subr.mxu0 0.0
        %1258 = vmatpush1.msra.mxu0 0.0
        %1259 = vmatprep.subr.mxu0 0.0
        %1260 = vmatpush1.msra.mxu0 0.0
        %1261 = vmatprep.subr.mxu0 0.0
        %1262 = vmatpush1.msra.mxu0 0.0
        %1263 = vmatprep.subr.mxu0 0.0
        %1264 = vmatpush1.msra.mxu0 0.0
        %1265 = vmatprep.subr.mxu0 0.0
        %1266 = vmatpush1.msra.mxu0 0.0
        %1267 = vmatprep.subr.mxu0 0.0
        %1268 = vmatpush1.msra.mxu0 0.0
        %1269 = vmatprep.subr.mxu0 0.0
        %1270 = vmatpush1.msra.mxu0 0.0
        %1271 = vmatprep.mubr.f32.mxu0 0.0
        %1272 = vmatmul.mubr.f32.gmra.mrb[0].mxu0 %v1009
        %v1273 = vpop.f32.mrb[0].mxu0
        %v1274 = vadd.f32 %v1205, %v1273
        %v1275 = vpop.f32.mrb[0].mxu0
        %1276 = vdwg.mxu0
        %v1278 = vlaneseq
        %v1279 = vshrl.u32 %v1278, 7
        %v1280 = vsub.s32 0, %v1279
        %v1281 = vrot.slane %v1067, %v1280
        %1283 = vmatprep.subr.mxu0 0.0
        %1284 = vmatpush1.msra.mxu0 %v1047
        %1285 = vmatprep.subr.mxu0 0.0
        %1286 = vmatpush1.msra.mxu0 %v1048
        %1287 = vmatprep.subr.mxu0 0.0
        %1288 = vmatpush1.msra.mxu0 %v1049
        %1289 = vmatprep.subr.mxu0 0.0
        %1290 = vmatpush1.msra.mxu0 %v1050
        %1291 = vmatprep.subr.mxu0 0.0
        %1292 = vmatpush1.msra.mxu0 %v1051
        %1293 = vmatprep.subr.mxu0 0.0
        %1294 = vmatpush1.msra.mxu0 %v1052
        %1295 = vmatprep.subr.mxu0 0.0
        %1296 = vmatpush1.msra.mxu0 %v1053
        %1297 = vmatprep.subr.mxu0 0.0
        %1298 = vmatpush1.msra.mxu0 %v1054
        %1299 = vmatprep.subr.mxu0 0.0
        %1300 = vmatpush1.msra.mxu0 %v1055
        %1301 = vmatprep.subr.mxu0 0.0
        %1302 = vmatpush1.msra.mxu0 %v1056
        %1303 = vmatprep.subr.mxu0 0.0
        %1304 = vmatpush1.msra.mxu0 %v1057
        %1305 = vmatprep.subr.mxu0 0.0
        %1306 = vmatpush1.msra.mxu0 %v1058
        %1307 = vmatprep.subr.mxu0 0.0
        %1308 = vmatpush1.msra.mxu0 %v1059
        %1309 = vmatprep.subr.mxu0 0.0
        %1310 = vmatpush1.msra.mxu0 %v1060
        %1311 = vmatprep.subr.mxu0 0.0
        %1312 = vmatpush1.msra.mxu0 %v1061
        %1313 = vmatprep.subr.mxu0 0.0
        %1314 = vmatpush1.msra.mxu0 %v1062
        %1315 = vmatprep.subr.mxu0 0.0
        %1316 = vmatpush1.msra.mxu0 0.0
        %1317 = vmatprep.subr.mxu0 0.0
        %1318 = vmatpush1.msra.mxu0 0.0
        %1319 = vmatprep.subr.mxu0 0.0
        %1320 = vmatpush1.msra.mxu0 0.0
        %1321 = vmatprep.subr.mxu0 0.0
        %1322 = vmatpush1.msra.mxu0 0.0
        %1323 = vmatprep.subr.mxu0 0.0
        %1324 = vmatpush1.msra.mxu0 0.0
        %1325 = vmatprep.subr.mxu0 0.0
        %1326 = vmatpush1.msra.mxu0 0.0
        %1327 = vmatprep.subr.mxu0 0.0
        %1328 = vmatpush1.msra.mxu0 0.0
        %1329 = vmatprep.subr.mxu0 0.0
        %1330 = vmatpush1.msra.mxu0 0.0
        %1331 = vmatprep.subr.mxu0 0.0
        %1332 = vmatpush1.msra.mxu0 0.0
        %1333 = vmatprep.subr.mxu0 0.0
        %1334 = vmatpush1.msra.mxu0 0.0
        %1335 = vmatprep.subr.mxu0 0.0
        %1336 = vmatpush1.msra.mxu0 0.0
        %1337 = vmatprep.subr.mxu0 0.0
        %1338 = vmatpush1.msra.mxu0 0.0
        %1339 = vmatprep.subr.mxu0 0.0
        %1340 = vmatpush1.msra.mxu0 0.0
        %1341 = vmatprep.subr.mxu0 0.0
        %1342 = vmatpush1.msra.mxu0 0.0
        %1343 = vmatprep.subr.mxu0 0.0
        %1344 = vmatpush1.msra.mxu0 0.0
        %1345 = vmatprep.subr.mxu0 0.0
        %1346 = vmatpush1.msra.mxu0 0.0
        %1347 = vmatprep.mubr.f32.mxu0 0.0
        %1348 = vmatmul.mubr.f32.gmra.mrb[0].mxu0 %v1009
        %v1349 = vpop.f32.mrb[0].mxu0
        %v1350 = vadd.f32 %v1281, %v1349
        %v1351 = vpop.f32.mrb[0].mxu0
        %1352 = vdwg.mxu0
        %v1354 = vlaneseq
        %v1355 = vshrl.u32 %v1354, 7
        %v1356 = vsub.s32 0, %v1355
        %v1357 = vrot.slane %v1120, %v1356
        %1359 = vmatprep.subr.mxu0 0.0
        %1360 = vmatpush1.msra.mxu0 %v1069
        %1361 = vmatprep.subr.mxu0 0.0
        %1362 = vmatpush1.msra.mxu0 %v1070
        %1363 = vmatprep.subr.mxu0 0.0
        %1364 = vmatpush1.msra.mxu0 %v1071
        %1365 = vmatprep.subr.mxu0 0.0
        %1366 = vmatpush1.msra.mxu0 %v1072
        %1367 = vmatprep.subr.mxu0 0.0
        %1368 = vmatpush1.msra.mxu0 %v1073
        %1369 = vmatprep.subr.mxu0 0.0
        %1370 = vmatpush1.msra.mxu0 %v1074
        %1371 = vmatprep.subr.mxu0 0.0
        %1372 = vmatpush1.msra.mxu0 %v1075
        %1373 = vmatprep.subr.mxu0 0.0
        %1374 = vmatpush1.msra.mxu0 %v1076
        %1375 = vmatprep.subr.mxu0 0.0
        %1376 = vmatpush1.msra.mxu0 %v1077
        %1377 = vmatprep.subr.mxu0 0.0
        %1378 = vmatpush1.msra.mxu0 %v1078
        %1379 = vmatprep.subr.mxu0 0.0
        %1380 = vmatpush1.msra.mxu0 %v1079
        %1381 = vmatprep.subr.mxu0 0.0
        %1382 = vmatpush1.msra.mxu0 %v1080
        %1383 = vmatprep.subr.mxu0 0.0
        %1384 = vmatpush1.msra.mxu0 %v1081
        %1385 = vmatprep.subr.mxu0 0.0
        %1386 = vmatpush1.msra.mxu0 %v1082
        %1387 = vmatprep.subr.mxu0 0.0
        %1388 = vmatpush1.msra.mxu0 %v1083
        %1389 = vmatprep.subr.mxu0 0.0
        %1390 = vmatpush1.msra.mxu0 %v1084
        %1391 = vmatprep.subr.mxu0 0.0
        %1392 = vmatpush1.msra.mxu0 0.0
        %1393 = vmatprep.subr.mxu0 0.0
        %1394 = vmatpush1.msra.mxu0 0.0
        %1395 = vmatprep.subr.mxu0 0.0
        %1396 = vmatpush1.msra.mxu0 0.0
        %1397 = vmatprep.subr.mxu0 0.0
        %1398 = vmatpush1.msra.mxu0 0.0
        %1399 = vmatprep.subr.mxu0 0.0
        %1400 = vmatpush1.msra.mxu0 0.0
        %1401 = vmatprep.subr.mxu0 0.0
        %1402 = vmatpush1.msra.mxu0 0.0
        %1403 = vmatprep.subr.mxu0 0.0
        %1404 = vmatpush1.msra.mxu0 0.0
        %1405 = vmatprep.subr.mxu0 0.0
        %1406 = vmatpush1.msra.mxu0 0.0
        %1407 = vmatprep.subr.mxu0 0.0
        %1408 = vmatpush1.msra.mxu0 0.0
        %1409 = vmatprep.subr.mxu0 0.0
        %1410 = vmatpush1.msra.mxu0 0.0
        %1411 = vmatprep.subr.mxu0 0.0
        %1412 = vmatpush1.msra.mxu0 0.0
        %1413 = vmatprep.subr.mxu0 0.0
        %1414 = vmatpush1.msra.mxu0 0.0
        %1415 = vmatprep.subr.mxu0 0.0
        %1416 = vmatpush1.msra.mxu0 0.0
        %1417 = vmatprep.subr.mxu0 0.0
        %1418 = vmatpush1.msra.mxu0 0.0
        %1419 = vmatprep.subr.mxu0 0.0
        %1420 = vmatpush1.msra.mxu0 0.0
        %1421 = vmatprep.subr.mxu0 0.0
        %1422 = vmatpush1.msra.mxu0 0.0
        %1423 = vmatprep.mubr.f32.mxu0 0.0
        %1424 = vmatmul.mubr.f32.gmra.mrb[0].mxu0 %v1012
        %v1425 = vpop.f32.mrb[0].mxu0
        %v1426 = vadd.f32 %v1357, %v1425
        %v1427 = vpop.f32.mrb[0].mxu0
        %1428 = vdwg.mxu0
        %v1430 = vlaneseq
        %v1431 = vshrl.u32 %v1430, 7
        %v1432 = vsub.s32 0, %v1431
        %v1433 = vrot.slane %v1122, %v1432
        %1435 = vmatprep.subr.mxu0 0.0
        %1436 = vmatpush1.msra.mxu0 %v1086
        %1437 = vmatprep.subr.mxu0 0.0
        %1438 = vmatpush1.msra.mxu0 %v1087
        %1439 = vmatprep.subr.mxu0 0.0
        %1440 = vmatpush1.msra.mxu0 %v1088
        %1441 = vmatprep.subr.mxu0 0.0
        %1442 = vmatpush1.msra.mxu0 %v1089
        %1443 = vmatprep.subr.mxu0 0.0
        %1444 = vmatpush1.msra.mxu0 %v1090
        %1445 = vmatprep.subr.mxu0 0.0
        %1446 = vmatpush1.msra.mxu0 %v1091
        %1447 = vmatprep.subr.mxu0 0.0
        %1448 = vmatpush1.msra.mxu0 %v1092
        %1449 = vmatprep.subr.mxu0 0.0
        %1450 = vmatpush1.msra.mxu0 %v1093
        %1451 = vmatprep.subr.mxu0 0.0
        %1452 = vmatpush1.msra.mxu0 %v1094
        %1453 = vmatprep.subr.mxu0 0.0
        %1454 = vmatpush1.msra.mxu0 %v1095
        %1455 = vmatprep.subr.mxu0 0.0
        %1456 = vmatpush1.msra.mxu0 %v1096
        %1457 = vmatprep.subr.mxu0 0.0
        %1458 = vmatpush1.msra.mxu0 %v1097
        %1459 = vmatprep.subr.mxu0 0.0
        %1460 = vmatpush1.msra.mxu0 %v1098
        %1461 = vmatprep.subr.mxu0 0.0
        %1462 = vmatpush1.msra.mxu0 %v1099
        %1463 = vmatprep.subr.mxu0 0.0
        %1464 = vmatpush1.msra.mxu0 %v1100
        %1465 = vmatprep.subr.mxu0 0.0
        %1466 = vmatpush1.msra.mxu0 %v1101
        %1467 = vmatprep.subr.mxu0 0.0
        %1468 = vmatpush1.msra.mxu0 0.0
        %1469 = vmatprep.subr.mxu0 0.0
        %1470 = vmatpush1.msra.mxu0 0.0
        %1471 = vmatprep.subr.mxu0 0.0
        %1472 = vmatpush1.msra.mxu0 0.0
        %1473 = vmatprep.subr.mxu0 0.0
        %1474 = vmatpush1.msra.mxu0 0.0
        %1475 = vmatprep.subr.mxu0 0.0
        %1476 = vmatpush1.msra.mxu0 0.0
        %1477 = vmatprep.subr.mxu0 0.0
        %1478 = vmatpush1.msra.mxu0 0.0
        %1479 = vmatprep.subr.mxu0 0.0
        %1480 = vmatpush1.msra.mxu0 0.0
        %1481 = vmatprep.subr.mxu0 0.0
        %1482 = vmatpush1.msra.mxu0 0.0
        %1483 = vmatprep.subr.mxu0 0.0
        %1484 = vmatpush1.msra.mxu0 0.0
        %1485 = vmatprep.subr.mxu0 0.0
        %1486 = vmatpush1.msra.mxu0 0.0
        %1487 = vmatprep.subr.mxu0 0.0
        %1488 = vmatpush1.msra.mxu0 0.0
        %1489 = vmatprep.subr.mxu0 0.0
        %1490 = vmatpush1.msra.mxu0 0.0
        %1491 = vmatprep.subr.mxu0 0.0
        %1492 = vmatpush1.msra.mxu0 0.0
        %1493 = vmatprep.subr.mxu0 0.0
        %1494 = vmatpush1.msra.mxu0 0.0
        %1495 = vmatprep.subr.mxu0 0.0
        %1496 = vmatpush1.msra.mxu0 0.0
        %1497 = vmatprep.subr.mxu0 0.0
        %1498 = vmatpush1.msra.mxu0 0.0
        %1499 = vmatprep.mubr.f32.mxu0 0.0
        %1500 = vmatmul.mubr.f32.gmra.mrb[0].mxu0 %v1012
        %v1501 = vpop.f32.mrb[0].mxu0
        %v1502 = vadd.f32 %v1433, %v1501
        %v1503 = vpop.f32.mrb[0].mxu0
        %1504 = vdwg.mxu0
        %v1506 = vlaneseq
        %v1507 = vshrl.u32 %v1506, 7
        %v1508 = vsub.s32 0, %v1507
        %v1509 = vrot.slane %v1124, %v1508
        %1511 = vmatprep.subr.mxu0 0.0
        %1512 = vmatpush1.msra.mxu0 %v1103
        %1513 = vmatprep.subr.mxu0 0.0
        %1514 = vmatpush1.msra.mxu0 %v1104
        %1515 = vmatprep.subr.mxu0 0.0
        %1516 = vmatpush1.msra.mxu0 %v1105
        %1517 = vmatprep.subr.mxu0 0.0
        %1518 = vmatpush1.msra.mxu0 %v1106
        %1519 = vmatprep.subr.mxu0 0.0
        %1520 = vmatpush1.msra.mxu0 %v1107
        %1521 = vmatprep.subr.mxu0 0.0
        %1522 = vmatpush1.msra.mxu0 %v1108
        %1523 = vmatprep.subr.mxu0 0.0
        %1524 = vmatpush1.msra.mxu0 %v1109
        %1525 = vmatprep.subr.mxu0 0.0
        %1526 = vmatpush1.msra.mxu0 %v1110
        %1527 = vmatprep.subr.mxu0 0.0
        %1528 = vmatpush1.msra.mxu0 %v1111
        %1529 = vmatprep.subr.mxu0 0.0
        %1530 = vmatpush1.msra.mxu0 %v1112
        %1531 = vmatprep.subr.mxu0 0.0
        %1532 = vmatpush1.msra.mxu0 %v1113
        %1533 = vmatprep.subr.mxu0 0.0
        %1534 = vmatpush1.msra.mxu0 %v1114
        %1535 = vmatprep.subr.mxu0 0.0
        %1536 = vmatpush1.msra.mxu0 %v1115
        %1537 = vmatprep.subr.mxu0 0.0
        %1538 = vmatpush1.msra.mxu0 %v1116
        %1539 = vmatprep.subr.mxu0 0.0
        %1540 = vmatpush1.msra.mxu0 %v1117
        %1541 = vmatprep.subr.mxu0 0.0
        %1542 = vmatpush1.msra.mxu0 %v1118
        %1543 = vmatprep.subr.mxu0 0.0
        %1544 = vmatpush1.msra.mxu0 0.0
        %1545 = vmatprep.subr.mxu0 0.0
        %1546 = vmatpush1.msra.mxu0 0.0
        %1547 = vmatprep.subr.mxu0 0.0
        %1548 = vmatpush1.msra.mxu0 0.0
        %1549 = vmatprep.subr.mxu0 0.0
        %1550 = vmatpush1.msra.mxu0 0.0
        %1551 = vmatprep.subr.mxu0 0.0
        %1552 = vmatpush1.msra.mxu0 0.0
        %1553 = vmatprep.subr.mxu0 0.0
        %1554 = vmatpush1.msra.mxu0 0.0
        %1555 = vmatprep.subr.mxu0 0.0
        %1556 = vmatpush1.msra.mxu0 0.0
        %1557 = vmatprep.subr.mxu0 0.0
        %1558 = vmatpush1.msra.mxu0 0.0
        %1559 = vmatprep.subr.mxu0 0.0
        %1560 = vmatpush1.msra.mxu0 0.0
        %1561 = vmatprep.subr.mxu0 0.0
        %1562 = vmatpush1.msra.mxu0 0.0
        %1563 = vmatprep.subr.mxu0 0.0
        %1564 = vmatpush1.msra.mxu0 0.0
        %1565 = vmatprep.subr.mxu0 0.0
        %1566 = vmatpush1.msra.mxu0 0.0
        %1567 = vmatprep.subr.mxu0 0.0
        %1568 = vmatpush1.msra.mxu0 0.0
        %1569 = vmatprep.subr.mxu0 0.0
        %1570 = vmatpush1.msra.mxu0 0.0
        %1571 = vmatprep.subr.mxu0 0.0
        %1572 = vmatpush1.msra.mxu0 0.0
        %1573 = vmatprep.subr.mxu0 0.0
        %1574 = vmatpush1.msra.mxu0 0.0
        %1575 = vmatprep.mubr.f32.mxu0 0.0
        %1576 = vmatmul.mubr.f32.gmra.mrb[0].mxu0 %v1012
        %v1577 = vpop.f32.mrb[0].mxu0
        %v1578 = vadd.f32 %v1509, %v1577
        %v1579 = vpop.f32.mrb[0].mxu0
        %1580 = vdwg.mxu0
        %v1581 = vadd.f32 %v1198, %v1426
        %v1582 = vxor.u32 %v1581, 2147483648
        %v1583 = vmul.f32 %v1582, 1.442695
        %v1584 = vpow.pop %v1583
        %v1585 = vadd.f32 %v1584, 1.0
        %v1586 = vrcp.pop %v1585
        %v1587 = vmul.f32 1.0, %v1586
        %v1588 = vadd.f32 %v1274, %v1502
        %v1589 = vxor.u32 %v1588, 2147483648
        %v1590 = vmul.f32 %v1589, 1.442695
        %v1591 = vpow.pop %v1590
        %v1592 = vadd.f32 %v1591, 1.0
        %v1593 = vrcp.pop %v1592
        %v1594 = vmul.f32 1.0, %v1593
        %v1595 = vmul.f32 %v1587, %v1578
        %v1596 = vadd.f32 %v1350, %v1595
        %v1597 = vtanh.pop %v1596
        %v1598 = vsub.f32 1.0, %v1594
        %v1599 = vmul.f32 %v1598, %v1597
        %v1600 = vmul.f32 %v1594, %v1012
        %v1601 = vadd.f32 %v1599, %v1600
        %s1602 = scalar_lea.vmem %s440, 8 [#allocation12]
        %1603 = vst [vmem:[%s1602] sm:$0xff] %v1601
        %1604 = vst [vmem:[%s433] sm:$0xff] %v1601
        %s1605 = sand.u32 %s220, 1
        %s1606 = scalar_lea.sflag [#allocation4], %s1605
        %s1607 = sand.u32 %s220, 1
        %s1608 = smul.addr %s1607, 8
        %s1609 = scalar_lea.vmem [#allocation11], %s1608
        %s1610 = sand.u32 %s246, 1
        %s1611 = scalar_lea.sflag [#allocation13], %s1610
        %s1612 = sand.u32 %s246, 1
        %s1613 = smul.addr %s1612, 16
        %s1614 = scalar_lea.vmem [#allocation12], %s1613
        // Predicated region
        $region73: #{tpu_custom_call.1} parent=51 // pred_check
          %p1615 = pneg %p230
        $region74: #{tpu_custom_call.1} parent=51 // pred_check_branch
          %1617 = sbr.rel (%p1615) target = $region76
        $region75: #{tpu_custom_call.1} parent=51 // pred_region
          %s1619 = ssub.s32 128, 128
          %1620 = vsyncadd %s1606, %s1619
          %s1621 = smul.addr %s34, 128
          %s1622 = scalar_lea.hbm %s8, %s1621
          %s1624 = sshll.u32 %s1609, 4
          %s1625 = int_to_ptr.vmem [resolvable:$true] %s1624
          %1627 = dma.vmem_to_hbm [thread:$0]  %s1625, 128, %s1622, %s1606
        $region76: #{tpu_custom_call.1} parent=51 // pred_fallthru
          _
        // Predicated region
        $region77: #{tpu_custom_call.1} parent=51 // pred_check
          %p1628 = pneg %p256
        $region78: #{tpu_custom_call.1} parent=51 // pred_check_branch
          %1630 = sbr.rel (%p1628) target = $region80
        $region79: #{tpu_custom_call.1} parent=51 // pred_region
          %s1632 = ssub.s32 256, 256
          %1633 = vsyncadd %s1611, %s1632
          %s1634 = smul.addr %s34, 128
          %s1635 = scalar_lea.hbm %s9, %s1634
          %s1636 = sshll.u32 %s1614, 4
          %s1637 = int_to_ptr.vmem [resolvable:$true] %s1636
          %1642 = dma.vmem_to_hbm [thread:$0]  %s1637, 256, %s1635, %s1611, 128, 256, 8
        $region80: #{tpu_custom_call.1} parent=51 // pred_fallthru
          _
      $region52: #{tpu_custom_call.1} parent=5 // pred_fallthru
        _
      %p1643 = scmp.le.s32.totalorder 2, %s29
      // Predicated region
      $region81: #{tpu_custom_call.1} parent=5 // pred_check
        %p1644 = pneg %p1643
      $region82: #{tpu_custom_call.1} parent=5 // pred_check_branch
        %1646 = sbr.rel (%p1644) target = $region84
      $region83: #{tpu_custom_call.1} parent=5 // pred_region
        %s1647 = ssub.s32 %s29, 2
        // Predicated region
        $region85: #{tpu_custom_call.1} parent=83 // pred_check
          %p1648 = pneg %p236
        $region86: #{tpu_custom_call.1} parent=83 // pred_check_branch
          %1650 = sbr.rel (%p1648) target = $region88
        $region87: #{tpu_custom_call.1} parent=83 // pred_region
          %s1651 = sand.u32 %s221, 1
          %s1652 = scalar_lea.sflag [#allocation4], %s1651
          %s1653 = sand.u32 %s221, 1
          %s1654 = smul.addr %s1653, 8
          %s1655 = scalar_lea.vmem [#allocation11], %s1654
          %1656 = dma.done %s1652, 128
        $region88: #{tpu_custom_call.1} parent=83 // pred_fallthru
          _
        // Predicated region
        $region89: #{tpu_custom_call.1} parent=83 // pred_check
          %p1657 = pneg %p262
        $region90: #{tpu_custom_call.1} parent=83 // pred_check_branch
          %1659 = sbr.rel (%p1657) target = $region92
        $region91: #{tpu_custom_call.1} parent=83 // pred_region
          %s1660 = sand.u32 %s247, 1
          %s1661 = scalar_lea.sflag [#allocation13], %s1660
          %s1662 = sand.u32 %s247, 1
          %s1663 = smul.addr %s1662, 16
          %s1664 = scalar_lea.vmem [#allocation12], %s1663
          %1665 = dma.done %s1661, 256
        $region92: #{tpu_custom_call.1} parent=83 // pred_fallthru
          _
      $region84: #{tpu_custom_call.1} parent=5 // pred_fallthru
        _
    $region6: #{tpu_custom_call.1} parent=1 // loop_footer
      %s33 = sadd.s32 1, %s29
    $region7: #{tpu_custom_call.1} parent=1 // loop_footer_branch
      %28 = sbr.rel target = $region3
    $region8: #{tpu_custom_call.1} parent=1 // loop_exit
      _
    %1666 = vsyncpa [#allocation3], 1
    %s1667 = scalar_lea.sflag [#allocation3], 1
    %1668 = vsyncpa %s1667, 1
    %1669 = vsyncpa [#allocation6], 1
    %s1670 = scalar_lea.sflag [#allocation6], 1
    %1671 = vsyncpa %s1670, 1
    %1672 = vsyncpa [#allocation9], 1
    %1673 = vsyncpa [#allocation4], 1
    %s1674 = scalar_lea.sflag [#allocation4], 1
    %1675 = vsyncpa %s1674, 1
    %1676 = vsyncpa [#allocation13], 1
    %s1677 = scalar_lea.sflag [#allocation13], 1
    %1678 = vsyncpa %s1677, 1

</llo_original>
